<compile_context>
chip_gen: v7x
topology: tpu7x:2x2x1
jax: 0.10.0
libtpu: 0.0.40
codegen_flags: <defaults>
</compile_context>

<pallas_src>
import functools

import jax
import jax.numpy as jnp
from jax.experimental import pallas as pl
from jax.experimental.pallas import tpu as pltpu


def _pick_tile_h(H, W, Cin):
    """H tile size: multiple of 8 dividing H, input block <= ~2 MiB."""
    if H % 8 != 0:
        return H  # whole image per step (full-extent block is always legal)
    budget = 2 * 1024 * 1024
    lanes = max(W, 128)  # account for lane padding in VMEM
    for th in (256, 128, 64, 32, 16, 8):
        if H % th == 0 and Cin * th * lanes * 4 <= budget:
            return th
    return 8


def _conv3x3_tanh_kernel(x_ref, top_ref, bot_ref, w_ref, o_ref,
                         *, Cin, Cout, TH, SH, W):
    # x_ref  : (1, Cin, TH, W)  main rows of this tile
    # top_ref: (1, Cin, SH, W)  strip whose LAST row is the row above the tile
    # bot_ref: (1, Cin, SH, W)  strip whose FIRST row is the row below the tile
    # w_ref  : (Cout*Cin*9,)    flat f32 conv weights, resident in SMEM
    # o_ref  : (1, Cout, TH, W)
    i = pl.program_id(1)
    last = pl.num_programs(1) - 1

    x = x_ref[0].astype(jnp.float32)                        # (Cin, TH, W)
    top = top_ref[0, :, SH - 1:SH, :].astype(jnp.float32)   # (Cin, 1, W)
    bot = bot_ref[0, :, 0:1, :].astype(jnp.float32)         # (Cin, 1, W)
    # zero the halo rows at the image border (conv zero padding in H)
    top = top * (i > 0).astype(jnp.float32)
    bot = bot * (i < last).astype(jnp.float32)

    # (Cin, TH+2, W): tile with 1-row halo above/below
    xh = jnp.concatenate([top, x, bot], axis=1)
    # (Cin, TH+2, W+2): zero columns left/right (conv zero padding in W)
    zcol = jnp.zeros((Cin, TH + 2, 1), jnp.float32)
    xp = jnp.concatenate([zcol, xh, zcol], axis=2)

    accs = [jnp.zeros((TH, W), jnp.float32) for _ in range(Cout)]
    for ci in range(Cin):
        # hoist the 3 lane (W) shifts once per input channel
        planes = [xp[ci, :, kx:kx + W] for kx in range(3)]  # 3 x (TH+2, W)
        for ky in range(3):
            for kx in range(3):
                window = planes[kx][ky:ky + TH, :]          # (TH, W)
                for co in range(Cout):
                    wv = w_ref[((co * Cin + ci) * 3 + ky) * 3 + kx]
                    accs[co] = accs[co] + wv * window
    for co in range(Cout):
        o_ref[0, co] = jnp.tanh(accs[co]).astype(o_ref.dtype)


def generate_image(image_condition, weight):
    """Forward of Generate_image.

    image_condition: (N, Cin, H, W) float32, NCHW (PyTorch layout)
    weight:          (Cout=3, Cin, 3, 3) float32, PyTorch OIHW conv weight
    returns:         (N, 3, H, W) float32
    """
    N, Cin, H, W = image_condition.shape
    Cout = weight.shape[0]
    assert weight.shape == (Cout, Cin, 3, 3)

    TH = _pick_tile_h(H, W, Cin)
    nH = H // TH
    SH = 8 if (H % 8 == 0) else H       # halo-strip height (8-aligned or full)
    ratio = TH // SH                    # SH-sized blocks per tile
    nSH = H // SH

    w_flat = weight.reshape(-1).astype(jnp.float32)

    kernel = functools.partial(
        _conv3x3_tanh_kernel, Cin=Cin, Cout=Cout, TH=TH, SH=SH, W=W)

    out = pl.pallas_call(
        kernel,
        out_shape=jax.ShapeDtypeStruct((N, Cout, H, W), image_condition.dtype),
        grid=(N, nH),
        in_specs=[
            # main tile rows
            pl.BlockSpec((1, Cin, TH, W), lambda n, i: (n, 0, i, 0)),
            # strip containing the row just above the tile (clamped at top)
            pl.BlockSpec((1, Cin, SH, W),
                         lambda n, i: (n, 0, jnp.maximum(i * ratio - 1, 0), 0)),
            # strip containing the row just below the tile (clamped at bottom)
            pl.BlockSpec((1, Cin, SH, W),
                         lambda n, i: (n, 0, jnp.minimum((i + 1) * ratio, nSH - 1), 0)),
            # tiny flat weight vector, kept in SMEM (scalar reads per tap)
            pl.BlockSpec(memory_space=pltpu.MemorySpace.SMEM),
        ],
        out_specs=pl.BlockSpec((1, Cout, TH, W), lambda n, i: (n, 0, i, 0)),
        compiler_params=pltpu.CompilerParams(
            dimension_semantics=("parallel", "parallel"),
            vmem_limit_bytes=32 * 1024 * 1024,
        ),
    )(image_condition, image_condition, image_condition, w_flat)
    return out


if __name__ == "__main__":
    key = jax.random.PRNGKey(0)
    k_x, k_w = jax.random.split(key)

    N, condition_dim, H, W = 2, 4, 16, 16
    Cout = 3

    x = jax.random.normal(k_x, (N, condition_dim, H, W), dtype=jnp.float32)
    fan_in = condition_dim * 3 * 3
    bound = 1.0 / (fan_in ** 0.5)
    weight = jax.random.uniform(
        k_w, (Cout, condition_dim, 3, 3), dtype=jnp.float32,
        minval=-bound, maxval=bound)

    out = generate_image(x, weight)
    jax.block_until_ready(out)
    assert out.shape == (N, Cout, H, W)

    # pure-JAX reference (full-precision conv) for a correctness sanity check
    ref = jnp.tanh(jax.lax.conv_general_dilated(
        x, weight, window_strides=(1, 1), padding=((1, 1), (1, 1)),
        dimension_numbers=("NCHW", "OIHW", "NCHW"),
        precision=jax.lax.Precision.HIGHEST))
    max_err = float(jnp.max(jnp.abs(out - ref)))
    assert max_err < 1e-4, f"max abs error vs reference: {max_err}"

    print("KERNEL_OK")
</pallas_src>

<mosaic_0001>
module attributes {stable_mosaic.version = 11 : i64} {
  func.func @_conv3x3_tanh_kernel(%arg0: i32, %arg1: i32, %arg2: memref<1x4x16x16xf32, #tpu.memory_space<vmem>>, %arg3: memref<1x4x8x16xf32, #tpu.memory_space<vmem>>, %arg4: memref<1x4x8x16xf32, #tpu.memory_space<vmem>>, %arg5: memref<108xf32, #tpu.memory_space<smem>>, %arg6: memref<1x3x16x16xf32, #tpu.memory_space<vmem>>) attributes {dimension_semantics = [#tpu.dimension_semantics<parallel>, #tpu.dimension_semantics<parallel>], iteration_bounds = array<i64: 2, 1>, scalar_prefetch = 0 : i64, scratch_operands = 0 : i64, tpu.core_type = #tpu.core_type<tc>, window_params = [{transform_indices = @transform_0, window_bounds = array<i64: 1, 4, 16, 16>}, {transform_indices = @transform_1, window_bounds = array<i64: 1, 4, 8, 16>}, {transform_indices = @transform_2, window_bounds = array<i64: 1, 4, 8, 16>}, {transform_indices = @transform_3, window_bounds = array<i64: 108>}, {transform_indices = @transform_4, window_bounds = array<i64: 1, 3, 16, 16>}]} {
    %c0 = arith.constant 0 : index
    %c0_0 = arith.constant 0 : index
    %c0_1 = arith.constant 0 : index
    %c0_2 = arith.constant 0 : index
    %0 = vector.load %arg2[%c0, %c0_0, %c0_1, %c0_2] : memref<1x4x16x16xf32, #tpu.memory_space<vmem>>, vector<1x4x16x16xf32>
    %1 = vector.shape_cast %0 : vector<1x4x16x16xf32> to vector<4x16x16xf32>
    %c0_3 = arith.constant 0 : index
    %c0_4 = arith.constant 0 : index
    %c7 = arith.constant 7 : index
    %c0_5 = arith.constant 0 : index
    %2 = vector.load %arg3[%c0_3, %c0_4, %c7, %c0_5] : memref<1x4x8x16xf32, #tpu.memory_space<vmem>>, vector<1x4x1x16xf32>
    %3 = vector.shape_cast %2 : vector<1x4x1x16xf32> to vector<4x1x16xf32>
    %c0_6 = arith.constant 0 : index
    %c0_7 = arith.constant 0 : index
    %c0_8 = arith.constant 0 : index
    %c0_9 = arith.constant 0 : index
    %4 = vector.load %arg4[%c0_6, %c0_7, %c0_8, %c0_9] : memref<1x4x8x16xf32, #tpu.memory_space<vmem>>, vector<1x4x1x16xf32>
    %5 = vector.shape_cast %4 : vector<1x4x1x16xf32> to vector<4x1x16xf32>
    %c0_i32 = arith.constant 0 : i32
    %6 = arith.cmpi sgt, %arg1, %c0_i32 : i32
    %7 = arith.extui %6 : i1 to i32
    %8 = arith.sitofp %7 : i32 to f32
    %9 = vector.broadcast %8 : f32 to vector<4x1x16xf32>
    %10 = arith.mulf %3, %9 : vector<4x1x16xf32>
    %c0_i32_10 = arith.constant 0 : i32
    %11 = arith.cmpi slt, %arg1, %c0_i32_10 : i32
    %12 = arith.extui %11 : i1 to i32
    %13 = arith.sitofp %12 : i32 to f32
    %14 = vector.broadcast %13 : f32 to vector<4x1x16xf32>
    %15 = arith.mulf %5, %14 : vector<4x1x16xf32>
    %16 = tpu.concatenate %10, %1, %15 in 1 : vector<4x1x16xf32>, vector<4x16x16xf32>, vector<4x1x16xf32> -> vector<4x18x16xf32>
    %cst = arith.constant 0.000000e+00 : f32
    %17 = vector.broadcast %cst : f32 to vector<4x18x1xf32>
    %18 = tpu.concatenate %17, %16, %17 in 2 : vector<4x18x1xf32>, vector<4x18x16xf32>, vector<4x18x1xf32> -> vector<4x18x18xf32>
    %cst_11 = arith.constant 0.000000e+00 : f32
    %19 = vector.broadcast %cst_11 : f32 to vector<16x16xf32>
    %cst_12 = arith.constant 0.000000e+00 : f32
    %20 = vector.broadcast %cst_12 : f32 to vector<16x16xf32>
    %cst_13 = arith.constant 0.000000e+00 : f32
    %21 = vector.broadcast %cst_13 : f32 to vector<16x16xf32>
    %22 = vector.extract_strided_slice %18 {offsets = [0, 0, 0], sizes = [1, 18, 16], strides = [1, 1, 1]} : vector<4x18x18xf32> to vector<1x18x16xf32>
    %23 = vector.shape_cast %22 : vector<1x18x16xf32> to vector<18x16xf32>
    %24 = vector.extract_strided_slice %18 {offsets = [0, 0, 1], sizes = [1, 18, 16], strides = [1, 1, 1]} : vector<4x18x18xf32> to vector<1x18x16xf32>
    %25 = vector.shape_cast %24 : vector<1x18x16xf32> to vector<18x16xf32>
    %26 = vector.extract_strided_slice %18 {offsets = [0, 0, 2], sizes = [1, 18, 16], strides = [1, 1, 1]} : vector<4x18x18xf32> to vector<1x18x16xf32>
    %27 = vector.shape_cast %26 : vector<1x18x16xf32> to vector<18x16xf32>
    %28 = vector.extract_strided_slice %23 {offsets = [0, 0], sizes = [16, 16], strides = [1, 1]} : vector<18x16xf32> to vector<16x16xf32>
    %c0_14 = arith.constant 0 : index
    %29 = memref.load %arg5[%c0_14] : memref<108xf32, #tpu.memory_space<smem>>
    %30 = vector.broadcast %29 : f32 to vector<16x16xf32>
    %31 = arith.mulf %30, %28 : vector<16x16xf32>
    %32 = arith.addf %19, %31 : vector<16x16xf32>
    %c36 = arith.constant 36 : index
    %33 = memref.load %arg5[%c36] : memref<108xf32, #tpu.memory_space<smem>>
    %34 = vector.broadcast %33 : f32 to vector<16x16xf32>
    %35 = arith.mulf %34, %28 : vector<16x16xf32>
    %36 = arith.addf %20, %35 : vector<16x16xf32>
    %c72 = arith.constant 72 : index
    %37 = memref.load %arg5[%c72] : memref<108xf32, #tpu.memory_space<smem>>
    %38 = vector.broadcast %37 : f32 to vector<16x16xf32>
    %39 = arith.mulf %38, %28 : vector<16x16xf32>
    %40 = arith.addf %21, %39 : vector<16x16xf32>
    %41 = vector.extract_strided_slice %25 {offsets = [0, 0], sizes = [16, 16], strides = [1, 1]} : vector<18x16xf32> to vector<16x16xf32>
    %c1 = arith.constant 1 : index
    %42 = memref.load %arg5[%c1] : memref<108xf32, #tpu.memory_space<smem>>
    %43 = vector.broadcast %42 : f32 to vector<16x16xf32>
    %44 = arith.mulf %43, %41 : vector<16x16xf32>
    %45 = arith.addf %32, %44 : vector<16x16xf32>
    %c37 = arith.constant 37 : index
    %46 = memref.load %arg5[%c37] : memref<108xf32, #tpu.memory_space<smem>>
    %47 = vector.broadcast %46 : f32 to vector<16x16xf32>
    %48 = arith.mulf %47, %41 : vector<16x16xf32>
    %49 = arith.addf %36, %48 : vector<16x16xf32>
    %c73 = arith.constant 73 : index
    %50 = memref.load %arg5[%c73] : memref<108xf32, #tpu.memory_space<smem>>
    %51 = vector.broadcast %50 : f32 to vector<16x16xf32>
    %52 = arith.mulf %51, %41 : vector<16x16xf32>
    %53 = arith.addf %40, %52 : vector<16x16xf32>
    %54 = vector.extract_strided_slice %27 {offsets = [0, 0], sizes = [16, 16], strides = [1, 1]} : vector<18x16xf32> to vector<16x16xf32>
    %c2 = arith.constant 2 : index
    %55 = memref.load %arg5[%c2] : memref<108xf32, #tpu.memory_space<smem>>
    %56 = vector.broadcast %55 : f32 to vector<16x16xf32>
    %57 = arith.mulf %56, %54 : vector<16x16xf32>
    %58 = arith.addf %45, %57 : vector<16x16xf32>
    %c38 = arith.constant 38 : index
    %59 = memref.load %arg5[%c38] : memref<108xf32, #tpu.memory_space<smem>>
    %60 = vector.broadcast %59 : f32 to vector<16x16xf32>
    %61 = arith.mulf %60, %54 : vector<16x16xf32>
    %62 = arith.addf %49, %61 : vector<16x16xf32>
    %c74 = arith.constant 74 : index
    %63 = memref.load %arg5[%c74] : memref<108xf32, #tpu.memory_space<smem>>
    %64 = vector.broadcast %63 : f32 to vector<16x16xf32>
    %65 = arith.mulf %64, %54 : vector<16x16xf32>
    %66 = arith.addf %53, %65 : vector<16x16xf32>
    %67 = vector.extract_strided_slice %23 {offsets = [1, 0], sizes = [16, 16], strides = [1, 1]} : vector<18x16xf32> to vector<16x16xf32>
    %c3 = arith.constant 3 : index
    %68 = memref.load %arg5[%c3] : memref<108xf32, #tpu.memory_space<smem>>
    %69 = vector.broadcast %68 : f32 to vector<16x16xf32>
    %70 = arith.mulf %69, %67 : vector<16x16xf32>
    %71 = arith.addf %58, %70 : vector<16x16xf32>
    %c39 = arith.constant 39 : index
    %72 = memref.load %arg5[%c39] : memref<108xf32, #tpu.memory_space<smem>>
    %73 = vector.broadcast %72 : f32 to vector<16x16xf32>
    %74 = arith.mulf %73, %67 : vector<16x16xf32>
    %75 = arith.addf %62, %74 : vector<16x16xf32>
    %c75 = arith.constant 75 : index
    %76 = memref.load %arg5[%c75] : memref<108xf32, #tpu.memory_space<smem>>
    %77 = vector.broadcast %76 : f32 to vector<16x16xf32>
    %78 = arith.mulf %77, %67 : vector<16x16xf32>
    %79 = arith.addf %66, %78 : vector<16x16xf32>
    %80 = vector.extract_strided_slice %25 {offsets = [1, 0], sizes = [16, 16], strides = [1, 1]} : vector<18x16xf32> to vector<16x16xf32>
    %c4 = arith.constant 4 : index
    %81 = memref.load %arg5[%c4] : memref<108xf32, #tpu.memory_space<smem>>
    %82 = vector.broadcast %81 : f32 to vector<16x16xf32>
    %83 = arith.mulf %82, %80 : vector<16x16xf32>
    %84 = arith.addf %71, %83 : vector<16x16xf32>
    %c40 = arith.constant 40 : index
    %85 = memref.load %arg5[%c40] : memref<108xf32, #tpu.memory_space<smem>>
    %86 = vector.broadcast %85 : f32 to vector<16x16xf32>
    %87 = arith.mulf %86, %80 : vector<16x16xf32>
    %88 = arith.addf %75, %87 : vector<16x16xf32>
    %c76 = arith.constant 76 : index
    %89 = memref.load %arg5[%c76] : memref<108xf32, #tpu.memory_space<smem>>
    %90 = vector.broadcast %89 : f32 to vector<16x16xf32>
    %91 = arith.mulf %90, %80 : vector<16x16xf32>
    %92 = arith.addf %79, %91 : vector<16x16xf32>
    %93 = vector.extract_strided_slice %27 {offsets = [1, 0], sizes = [16, 16], strides = [1, 1]} : vector<18x16xf32> to vector<16x16xf32>
    %c5 = arith.constant 5 : index
    %94 = memref.load %arg5[%c5] : memref<108xf32, #tpu.memory_space<smem>>
    %95 = vector.broadcast %94 : f32 to vector<16x16xf32>
    %96 = arith.mulf %95, %93 : vector<16x16xf32>
    %97 = arith.addf %84, %96 : vector<16x16xf32>
    %c41 = arith.constant 41 : index
    %98 = memref.load %arg5[%c41] : memref<108xf32, #tpu.memory_space<smem>>
    %99 = vector.broadcast %98 : f32 to vector<16x16xf32>
    %100 = arith.mulf %99, %93 : vector<16x16xf32>
    %101 = arith.addf %88, %100 : vector<16x16xf32>
    %c77 = arith.constant 77 : index
    %102 = memref.load %arg5[%c77] : memref<108xf32, #tpu.memory_space<smem>>
    %103 = vector.broadcast %102 : f32 to vector<16x16xf32>
    %104 = arith.mulf %103, %93 : vector<16x16xf32>
    %105 = arith.addf %92, %104 : vector<16x16xf32>
    %106 = vector.extract_strided_slice %23 {offsets = [2, 0], sizes = [16, 16], strides = [1, 1]} : vector<18x16xf32> to vector<16x16xf32>
    %c6 = arith.constant 6 : index
    %107 = memref.load %arg5[%c6] : memref<108xf32, #tpu.memory_space<smem>>
    %108 = vector.broadcast %107 : f32 to vector<16x16xf32>
    %109 = arith.mulf %108, %106 : vector<16x16xf32>
    %110 = arith.addf %97, %109 : vector<16x16xf32>
    %c42 = arith.constant 42 : index
    %111 = memref.load %arg5[%c42] : memref<108xf32, #tpu.memory_space<smem>>
    %112 = vector.broadcast %111 : f32 to vector<16x16xf32>
    %113 = arith.mulf %112, %106 : vector<16x16xf32>
    %114 = arith.addf %101, %113 : vector<16x16xf32>
    %c78 = arith.constant 78 : index
    %115 = memref.load %arg5[%c78] : memref<108xf32, #tpu.memory_space<smem>>
    %116 = vector.broadcast %115 : f32 to vector<16x16xf32>
    %117 = arith.mulf %116, %106 : vector<16x16xf32>
    %118 = arith.addf %105, %117 : vector<16x16xf32>
    %119 = vector.extract_strided_slice %25 {offsets = [2, 0], sizes = [16, 16], strides = [1, 1]} : vector<18x16xf32> to vector<16x16xf32>
    %c7_15 = arith.constant 7 : index
    %120 = memref.load %arg5[%c7_15] : memref<108xf32, #tpu.memory_space<smem>>
    %121 = vector.broadcast %120 : f32 to vector<16x16xf32>
    %122 = arith.mulf %121, %119 : vector<16x16xf32>
    %123 = arith.addf %110, %122 : vector<16x16xf32>
    %c43 = arith.constant 43 : index
    %124 = memref.load %arg5[%c43] : memref<108xf32, #tpu.memory_space<smem>>
    %125 = vector.broadcast %124 : f32 to vector<16x16xf32>
    %126 = arith.mulf %125, %119 : vector<16x16xf32>
    %127 = arith.addf %114, %126 : vector<16x16xf32>
    %c79 = arith.constant 79 : index
    %128 = memref.load %arg5[%c79] : memref<108xf32, #tpu.memory_space<smem>>
    %129 = vector.broadcast %128 : f32 to vector<16x16xf32>
    %130 = arith.mulf %129, %119 : vector<16x16xf32>
    %131 = arith.addf %118, %130 : vector<16x16xf32>
    %132 = vector.extract_strided_slice %27 {offsets = [2, 0], sizes = [16, 16], strides = [1, 1]} : vector<18x16xf32> to vector<16x16xf32>
    %c8 = arith.constant 8 : index
    %133 = memref.load %arg5[%c8] : memref<108xf32, #tpu.memory_space<smem>>
    %134 = vector.broadcast %133 : f32 to vector<16x16xf32>
    %135 = arith.mulf %134, %132 : vector<16x16xf32>
    %136 = arith.addf %123, %135 : vector<16x16xf32>
    %c44 = arith.constant 44 : index
    %137 = memref.load %arg5[%c44] : memref<108xf32, #tpu.memory_space<smem>>
    %138 = vector.broadcast %137 : f32 to vector<16x16xf32>
    %139 = arith.mulf %138, %132 : vector<16x16xf32>
    %140 = arith.addf %127, %139 : vector<16x16xf32>
    %c80 = arith.constant 80 : index
    %141 = memref.load %arg5[%c80] : memref<108xf32, #tpu.memory_space<smem>>
    %142 = vector.broadcast %141 : f32 to vector<16x16xf32>
    %143 = arith.mulf %142, %132 : vector<16x16xf32>
    %144 = arith.addf %131, %143 : vector<16x16xf32>
    %145 = vector.extract_strided_slice %18 {offsets = [1, 0, 0], sizes = [1, 18, 16], strides = [1, 1, 1]} : vector<4x18x18xf32> to vector<1x18x16xf32>
    %146 = vector.shape_cast %145 : vector<1x18x16xf32> to vector<18x16xf32>
    %147 = vector.extract_strided_slice %18 {offsets = [1, 0, 1], sizes = [1, 18, 16], strides = [1, 1, 1]} : vector<4x18x18xf32> to vector<1x18x16xf32>
    %148 = vector.shape_cast %147 : vector<1x18x16xf32> to vector<18x16xf32>
    %149 = vector.extract_strided_slice %18 {offsets = [1, 0, 2], sizes = [1, 18, 16], strides = [1, 1, 1]} : vector<4x18x18xf32> to vector<1x18x16xf32>
    %150 = vector.shape_cast %149 : vector<1x18x16xf32> to vector<18x16xf32>
    %151 = vector.extract_strided_slice %146 {offsets = [0, 0], sizes = [16, 16], strides = [1, 1]} : vector<18x16xf32> to vector<16x16xf32>
    %c9 = arith.constant 9 : index
    %152 = memref.load %arg5[%c9] : memref<108xf32, #tpu.memory_space<smem>>
    %153 = vector.broadcast %152 : f32 to vector<16x16xf32>
    %154 = arith.mulf %153, %151 : vector<16x16xf32>
    %155 = arith.addf %136, %154 : vector<16x16xf32>
    %c45 = arith.constant 45 : index
    %156 = memref.load %arg5[%c45] : memref<108xf32, #tpu.memory_space<smem>>
    %157 = vector.broadcast %156 : f32 to vector<16x16xf32>
    %158 = arith.mulf %157, %151 : vector<16x16xf32>
    %159 = arith.addf %140, %158 : vector<16x16xf32>
    %c81 = arith.constant 81 : index
    %160 = memref.load %arg5[%c81] : memref<108xf32, #tpu.memory_space<smem>>
    %161 = vector.broadcast %160 : f32 to vector<16x16xf32>
    %162 = arith.mulf %161, %151 : vector<16x16xf32>
    %163 = arith.addf %144, %162 : vector<16x16xf32>
    %164 = vector.extract_strided_slice %148 {offsets = [0, 0], sizes = [16, 16], strides = [1, 1]} : vector<18x16xf32> to vector<16x16xf32>
    %c10 = arith.constant 10 : index
    %165 = memref.load %arg5[%c10] : memref<108xf32, #tpu.memory_space<smem>>
    %166 = vector.broadcast %165 : f32 to vector<16x16xf32>
    %167 = arith.mulf %166, %164 : vector<16x16xf32>
    %168 = arith.addf %155, %167 : vector<16x16xf32>
    %c46 = arith.constant 46 : index
    %169 = memref.load %arg5[%c46] : memref<108xf32, #tpu.memory_space<smem>>
    %170 = vector.broadcast %169 : f32 to vector<16x16xf32>
    %171 = arith.mulf %170, %164 : vector<16x16xf32>
    %172 = arith.addf %159, %171 : vector<16x16xf32>
    %c82 = arith.constant 82 : index
    %173 = memref.load %arg5[%c82] : memref<108xf32, #tpu.memory_space<smem>>
    %174 = vector.broadcast %173 : f32 to vector<16x16xf32>
    %175 = arith.mulf %174, %164 : vector<16x16xf32>
    %176 = arith.addf %163, %175 : vector<16x16xf32>
    %177 = vector.extract_strided_slice %150 {offsets = [0, 0], sizes = [16, 16], strides = [1, 1]} : vector<18x16xf32> to vector<16x16xf32>
    %c11 = arith.constant 11 : index
    %178 = memref.load %arg5[%c11] : memref<108xf32, #tpu.memory_space<smem>>
    %179 = vector.broadcast %178 : f32 to vector<16x16xf32>
    %180 = arith.mulf %179, %177 : vector<16x16xf32>
    %181 = arith.addf %168, %180 : vector<16x16xf32>
    %c47 = arith.constant 47 : index
    %182 = memref.load %arg5[%c47] : memref<108xf32, #tpu.memory_space<smem>>
    %183 = vector.broadcast %182 : f32 to vector<16x16xf32>
    %184 = arith.mulf %183, %177 : vector<16x16xf32>
    %185 = arith.addf %172, %184 : vector<16x16xf32>
    %c83 = arith.constant 83 : index
    %186 = memref.load %arg5[%c83] : memref<108xf32, #tpu.memory_space<smem>>
    %187 = vector.broadcast %186 : f32 to vector<16x16xf32>
    %188 = arith.mulf %187, %177 : vector<16x16xf32>
    %189 = arith.addf %176, %188 : vector<16x16xf32>
    %190 = vector.extract_strided_slice %146 {offsets = [1, 0], sizes = [16, 16], strides = [1, 1]} : vector<18x16xf32> to vector<16x16xf32>
    %c12 = arith.constant 12 : index
    %191 = memref.load %arg5[%c12] : memref<108xf32, #tpu.memory_space<smem>>
    %192 = vector.broadcast %191 : f32 to vector<16x16xf32>
    %193 = arith.mulf %192, %190 : vector<16x16xf32>
    %194 = arith.addf %181, %193 : vector<16x16xf32>
    %c48 = arith.constant 48 : index
    %195 = memref.load %arg5[%c48] : memref<108xf32, #tpu.memory_space<smem>>
    %196 = vector.broadcast %195 : f32 to vector<16x16xf32>
    %197 = arith.mulf %196, %190 : vector<16x16xf32>
    %198 = arith.addf %185, %197 : vector<16x16xf32>
    %c84 = arith.constant 84 : index
    %199 = memref.load %arg5[%c84] : memref<108xf32, #tpu.memory_space<smem>>
    %200 = vector.broadcast %199 : f32 to vector<16x16xf32>
    %201 = arith.mulf %200, %190 : vector<16x16xf32>
    %202 = arith.addf %189, %201 : vector<16x16xf32>
    %203 = vector.extract_strided_slice %148 {offsets = [1, 0], sizes = [16, 16], strides = [1, 1]} : vector<18x16xf32> to vector<16x16xf32>
    %c13 = arith.constant 13 : index
    %204 = memref.load %arg5[%c13] : memref<108xf32, #tpu.memory_space<smem>>
    %205 = vector.broadcast %204 : f32 to vector<16x16xf32>
    %206 = arith.mulf %205, %203 : vector<16x16xf32>
    %207 = arith.addf %194, %206 : vector<16x16xf32>
    %c49 = arith.constant 49 : index
    %208 = memref.load %arg5[%c49] : memref<108xf32, #tpu.memory_space<smem>>
    %209 = vector.broadcast %208 : f32 to vector<16x16xf32>
    %210 = arith.mulf %209, %203 : vector<16x16xf32>
    %211 = arith.addf %198, %210 : vector<16x16xf32>
    %c85 = arith.constant 85 : index
    %212 = memref.load %arg5[%c85] : memref<108xf32, #tpu.memory_space<smem>>
    %213 = vector.broadcast %212 : f32 to vector<16x16xf32>
    %214 = arith.mulf %213, %203 : vector<16x16xf32>
    %215 = arith.addf %202, %214 : vector<16x16xf32>
    %216 = vector.extract_strided_slice %150 {offsets = [1, 0], sizes = [16, 16], strides = [1, 1]} : vector<18x16xf32> to vector<16x16xf32>
    %c14 = arith.constant 14 : index
    %217 = memref.load %arg5[%c14] : memref<108xf32, #tpu.memory_space<smem>>
    %218 = vector.broadcast %217 : f32 to vector<16x16xf32>
    %219 = arith.mulf %218, %216 : vector<16x16xf32>
    %220 = arith.addf %207, %219 : vector<16x16xf32>
    %c50 = arith.constant 50 : index
    %221 = memref.load %arg5[%c50] : memref<108xf32, #tpu.memory_space<smem>>
    %222 = vector.broadcast %221 : f32 to vector<16x16xf32>
    %223 = arith.mulf %222, %216 : vector<16x16xf32>
    %224 = arith.addf %211, %223 : vector<16x16xf32>
    %c86 = arith.constant 86 : index
    %225 = memref.load %arg5[%c86] : memref<108xf32, #tpu.memory_space<smem>>
    %226 = vector.broadcast %225 : f32 to vector<16x16xf32>
    %227 = arith.mulf %226, %216 : vector<16x16xf32>
    %228 = arith.addf %215, %227 : vector<16x16xf32>
    %229 = vector.extract_strided_slice %146 {offsets = [2, 0], sizes = [16, 16], strides = [1, 1]} : vector<18x16xf32> to vector<16x16xf32>
    %c15 = arith.constant 15 : index
    %230 = memref.load %arg5[%c15] : memref<108xf32, #tpu.memory_space<smem>>
    %231 = vector.broadcast %230 : f32 to vector<16x16xf32>
    %232 = arith.mulf %231, %229 : vector<16x16xf32>
    %233 = arith.addf %220, %232 : vector<16x16xf32>
    %c51 = arith.constant 51 : index
    %234 = memref.load %arg5[%c51] : memref<108xf32, #tpu.memory_space<smem>>
    %235 = vector.broadcast %234 : f32 to vector<16x16xf32>
    %236 = arith.mulf %235, %229 : vector<16x16xf32>
    %237 = arith.addf %224, %236 : vector<16x16xf32>
    %c87 = arith.constant 87 : index
    %238 = memref.load %arg5[%c87] : memref<108xf32, #tpu.memory_space<smem>>
    %239 = vector.broadcast %238 : f32 to vector<16x16xf32>
    %240 = arith.mulf %239, %229 : vector<16x16xf32>
    %241 = arith.addf %228, %240 : vector<16x16xf32>
    %242 = vector.extract_strided_slice %148 {offsets = [2, 0], sizes = [16, 16], strides = [1, 1]} : vector<18x16xf32> to vector<16x16xf32>
    %c16 = arith.constant 16 : index
    %243 = memref.load %arg5[%c16] : memref<108xf32, #tpu.memory_space<smem>>
    %244 = vector.broadcast %243 : f32 to vector<16x16xf32>
    %245 = arith.mulf %244, %242 : vector<16x16xf32>
    %246 = arith.addf %233, %245 : vector<16x16xf32>
    %c52 = arith.constant 52 : index
    %247 = memref.load %arg5[%c52] : memref<108xf32, #tpu.memory_space<smem>>
    %248 = vector.broadcast %247 : f32 to vector<16x16xf32>
    %249 = arith.mulf %248, %242 : vector<16x16xf32>
    %250 = arith.addf %237, %249 : vector<16x16xf32>
    %c88 = arith.constant 88 : index
    %251 = memref.load %arg5[%c88] : memref<108xf32, #tpu.memory_space<smem>>
    %252 = vector.broadcast %251 : f32 to vector<16x16xf32>
    %253 = arith.mulf %252, %242 : vector<16x16xf32>
    %254 = arith.addf %241, %253 : vector<16x16xf32>
    %255 = vector.extract_strided_slice %150 {offsets = [2, 0], sizes = [16, 16], strides = [1, 1]} : vector<18x16xf32> to vector<16x16xf32>
    %c17 = arith.constant 17 : index
    %256 = memref.load %arg5[%c17] : memref<108xf32, #tpu.memory_space<smem>>
    %257 = vector.broadcast %256 : f32 to vector<16x16xf32>
    %258 = arith.mulf %257, %255 : vector<16x16xf32>
    %259 = arith.addf %246, %258 : vector<16x16xf32>
    %c53 = arith.constant 53 : index
    %260 = memref.load %arg5[%c53] : memref<108xf32, #tpu.memory_space<smem>>
    %261 = vector.broadcast %260 : f32 to vector<16x16xf32>
    %262 = arith.mulf %261, %255 : vector<16x16xf32>
    %263 = arith.addf %250, %262 : vector<16x16xf32>
    %c89 = arith.constant 89 : index
    %264 = memref.load %arg5[%c89] : memref<108xf32, #tpu.memory_space<smem>>
    %265 = vector.broadcast %264 : f32 to vector<16x16xf32>
    %266 = arith.mulf %265, %255 : vector<16x16xf32>
    %267 = arith.addf %254, %266 : vector<16x16xf32>
    %268 = vector.extract_strided_slice %18 {offsets = [2, 0, 0], sizes = [1, 18, 16], strides = [1, 1, 1]} : vector<4x18x18xf32> to vector<1x18x16xf32>
    %269 = vector.shape_cast %268 : vector<1x18x16xf32> to vector<18x16xf32>
    %270 = vector.extract_strided_slice %18 {offsets = [2, 0, 1], sizes = [1, 18, 16], strides = [1, 1, 1]} : vector<4x18x18xf32> to vector<1x18x16xf32>
    %271 = vector.shape_cast %270 : vector<1x18x16xf32> to vector<18x16xf32>
    %272 = vector.extract_strided_slice %18 {offsets = [2, 0, 2], sizes = [1, 18, 16], strides = [1, 1, 1]} : vector<4x18x18xf32> to vector<1x18x16xf32>
    %273 = vector.shape_cast %272 : vector<1x18x16xf32> to vector<18x16xf32>
    %274 = vector.extract_strided_slice %269 {offsets = [0, 0], sizes = [16, 16], strides = [1, 1]} : vector<18x16xf32> to vector<16x16xf32>
    %c18 = arith.constant 18 : index
    %275 = memref.load %arg5[%c18] : memref<108xf32, #tpu.memory_space<smem>>
    %276 = vector.broadcast %275 : f32 to vector<16x16xf32>
    %277 = arith.mulf %276, %274 : vector<16x16xf32>
    %278 = arith.addf %259, %277 : vector<16x16xf32>
    %c54 = arith.constant 54 : index
    %279 = memref.load %arg5[%c54] : memref<108xf32, #tpu.memory_space<smem>>
    %280 = vector.broadcast %279 : f32 to vector<16x16xf32>
    %281 = arith.mulf %280, %274 : vector<16x16xf32>
    %282 = arith.addf %263, %281 : vector<16x16xf32>
    %c90 = arith.constant 90 : index
    %283 = memref.load %arg5[%c90] : memref<108xf32, #tpu.memory_space<smem>>
    %284 = vector.broadcast %283 : f32 to vector<16x16xf32>
    %285 = arith.mulf %284, %274 : vector<16x16xf32>
    %286 = arith.addf %267, %285 : vector<16x16xf32>
    %287 = vector.extract_strided_slice %271 {offsets = [0, 0], sizes = [16, 16], strides = [1, 1]} : vector<18x16xf32> to vector<16x16xf32>
    %c19 = arith.constant 19 : index
    %288 = memref.load %arg5[%c19] : memref<108xf32, #tpu.memory_space<smem>>
    %289 = vector.broadcast %288 : f32 to vector<16x16xf32>
    %290 = arith.mulf %289, %287 : vector<16x16xf32>
    %291 = arith.addf %278, %290 : vector<16x16xf32>
    %c55 = arith.constant 55 : index
    %292 = memref.load %arg5[%c55] : memref<108xf32, #tpu.memory_space<smem>>
    %293 = vector.broadcast %292 : f32 to vector<16x16xf32>
    %294 = arith.mulf %293, %287 : vector<16x16xf32>
    %295 = arith.addf %282, %294 : vector<16x16xf32>
    %c91 = arith.constant 91 : index
    %296 = memref.load %arg5[%c91] : memref<108xf32, #tpu.memory_space<smem>>
    %297 = vector.broadcast %296 : f32 to vector<16x16xf32>
    %298 = arith.mulf %297, %287 : vector<16x16xf32>
    %299 = arith.addf %286, %298 : vector<16x16xf32>
    %300 = vector.extract_strided_slice %273 {offsets = [0, 0], sizes = [16, 16], strides = [1, 1]} : vector<18x16xf32> to vector<16x16xf32>
    %c20 = arith.constant 20 : index
    %301 = memref.load %arg5[%c20] : memref<108xf32, #tpu.memory_space<smem>>
    %302 = vector.broadcast %301 : f32 to vector<16x16xf32>
    %303 = arith.mulf %302, %300 : vector<16x16xf32>
    %304 = arith.addf %291, %303 : vector<16x16xf32>
    %c56 = arith.constant 56 : index
    %305 = memref.load %arg5[%c56] : memref<108xf32, #tpu.memory_space<smem>>
    %306 = vector.broadcast %305 : f32 to vector<16x16xf32>
    %307 = arith.mulf %306, %300 : vector<16x16xf32>
    %308 = arith.addf %295, %307 : vector<16x16xf32>
    %c92 = arith.constant 92 : index
    %309 = memref.load %arg5[%c92] : memref<108xf32, #tpu.memory_space<smem>>
    %310 = vector.broadcast %309 : f32 to vector<16x16xf32>
    %311 = arith.mulf %310, %300 : vector<16x16xf32>
    %312 = arith.addf %299, %311 : vector<16x16xf32>
    %313 = vector.extract_strided_slice %269 {offsets = [1, 0], sizes = [16, 16], strides = [1, 1]} : vector<18x16xf32> to vector<16x16xf32>
    %c21 = arith.constant 21 : index
    %314 = memref.load %arg5[%c21] : memref<108xf32, #tpu.memory_space<smem>>
    %315 = vector.broadcast %314 : f32 to vector<16x16xf32>
    %316 = arith.mulf %315, %313 : vector<16x16xf32>
    %317 = arith.addf %304, %316 : vector<16x16xf32>
    %c57 = arith.constant 57 : index
    %318 = memref.load %arg5[%c57] : memref<108xf32, #tpu.memory_space<smem>>
    %319 = vector.broadcast %318 : f32 to vector<16x16xf32>
    %320 = arith.mulf %319, %313 : vector<16x16xf32>
    %321 = arith.addf %308, %320 : vector<16x16xf32>
    %c93 = arith.constant 93 : index
    %322 = memref.load %arg5[%c93] : memref<108xf32, #tpu.memory_space<smem>>
    %323 = vector.broadcast %322 : f32 to vector<16x16xf32>
    %324 = arith.mulf %323, %313 : vector<16x16xf32>
    %325 = arith.addf %312, %324 : vector<16x16xf32>
    %326 = vector.extract_strided_slice %271 {offsets = [1, 0], sizes = [16, 16], strides = [1, 1]} : vector<18x16xf32> to vector<16x16xf32>
    %c22 = arith.constant 22 : index
    %327 = memref.load %arg5[%c22] : memref<108xf32, #tpu.memory_space<smem>>
    %328 = vector.broadcast %327 : f32 to vector<16x16xf32>
    %329 = arith.mulf %328, %326 : vector<16x16xf32>
    %330 = arith.addf %317, %329 : vector<16x16xf32>
    %c58 = arith.constant 58 : index
    %331 = memref.load %arg5[%c58] : memref<108xf32, #tpu.memory_space<smem>>
    %332 = vector.broadcast %331 : f32 to vector<16x16xf32>
    %333 = arith.mulf %332, %326 : vector<16x16xf32>
    %334 = arith.addf %321, %333 : vector<16x16xf32>
    %c94 = arith.constant 94 : index
    %335 = memref.load %arg5[%c94] : memref<108xf32, #tpu.memory_space<smem>>
    %336 = vector.broadcast %335 : f32 to vector<16x16xf32>
    %337 = arith.mulf %336, %326 : vector<16x16xf32>
    %338 = arith.addf %325, %337 : vector<16x16xf32>
    %339 = vector.extract_strided_slice %273 {offsets = [1, 0], sizes = [16, 16], strides = [1, 1]} : vector<18x16xf32> to vector<16x16xf32>
    %c23 = arith.constant 23 : index
    %340 = memref.load %arg5[%c23] : memref<108xf32, #tpu.memory_space<smem>>
    %341 = vector.broadcast %340 : f32 to vector<16x16xf32>
    %342 = arith.mulf %341, %339 : vector<16x16xf32>
    %343 = arith.addf %330, %342 : vector<16x16xf32>
    %c59 = arith.constant 59 : index
    %344 = memref.load %arg5[%c59] : memref<108xf32, #tpu.memory_space<smem>>
    %345 = vector.broadcast %344 : f32 to vector<16x16xf32>
    %346 = arith.mulf %345, %339 : vector<16x16xf32>
    %347 = arith.addf %334, %346 : vector<16x16xf32>
    %c95 = arith.constant 95 : index
    %348 = memref.load %arg5[%c95] : memref<108xf32, #tpu.memory_space<smem>>
    %349 = vector.broadcast %348 : f32 to vector<16x16xf32>
    %350 = arith.mulf %349, %339 : vector<16x16xf32>
    %351 = arith.addf %338, %350 : vector<16x16xf32>
    %352 = vector.extract_strided_slice %269 {offsets = [2, 0], sizes = [16, 16], strides = [1, 1]} : vector<18x16xf32> to vector<16x16xf32>
    %c24 = arith.constant 24 : index
    %353 = memref.load %arg5[%c24] : memref<108xf32, #tpu.memory_space<smem>>
    %354 = vector.broadcast %353 : f32 to vector<16x16xf32>
    %355 = arith.mulf %354, %352 : vector<16x16xf32>
    %356 = arith.addf %343, %355 : vector<16x16xf32>
    %c60 = arith.constant 60 : index
    %357 = memref.load %arg5[%c60] : memref<108xf32, #tpu.memory_space<smem>>
    %358 = vector.broadcast %357 : f32 to vector<16x16xf32>
    %359 = arith.mulf %358, %352 : vector<16x16xf32>
    %360 = arith.addf %347, %359 : vector<16x16xf32>
    %c96 = arith.constant 96 : index
    %361 = memref.load %arg5[%c96] : memref<108xf32, #tpu.memory_space<smem>>
    %362 = vector.broadcast %361 : f32 to vector<16x16xf32>
    %363 = arith.mulf %362, %352 : vector<16x16xf32>
    %364 = arith.addf %351, %363 : vector<16x16xf32>
    %365 = vector.extract_strided_slice %271 {offsets = [2, 0], sizes = [16, 16], strides = [1, 1]} : vector<18x16xf32> to vector<16x16xf32>
    %c25 = arith.constant 25 : index
    %366 = memref.load %arg5[%c25] : memref<108xf32, #tpu.memory_space<smem>>
    %367 = vector.broadcast %366 : f32 to vector<16x16xf32>
    %368 = arith.mulf %367, %365 : vector<16x16xf32>
    %369 = arith.addf %356, %368 : vector<16x16xf32>
    %c61 = arith.constant 61 : index
    %370 = memref.load %arg5[%c61] : memref<108xf32, #tpu.memory_space<smem>>
    %371 = vector.broadcast %370 : f32 to vector<16x16xf32>
    %372 = arith.mulf %371, %365 : vector<16x16xf32>
    %373 = arith.addf %360, %372 : vector<16x16xf32>
    %c97 = arith.constant 97 : index
    %374 = memref.load %arg5[%c97] : memref<108xf32, #tpu.memory_space<smem>>
    %375 = vector.broadcast %374 : f32 to vector<16x16xf32>
    %376 = arith.mulf %375, %365 : vector<16x16xf32>
    %377 = arith.addf %364, %376 : vector<16x16xf32>
    %378 = vector.extract_strided_slice %273 {offsets = [2, 0], sizes = [16, 16], strides = [1, 1]} : vector<18x16xf32> to vector<16x16xf32>
    %c26 = arith.constant 26 : index
    %379 = memref.load %arg5[%c26] : memref<108xf32, #tpu.memory_space<smem>>
    %380 = vector.broadcast %379 : f32 to vector<16x16xf32>
    %381 = arith.mulf %380, %378 : vector<16x16xf32>
    %382 = arith.addf %369, %381 : vector<16x16xf32>
    %c62 = arith.constant 62 : index
    %383 = memref.load %arg5[%c62] : memref<108xf32, #tpu.memory_space<smem>>
    %384 = vector.broadcast %383 : f32 to vector<16x16xf32>
    %385 = arith.mulf %384, %378 : vector<16x16xf32>
    %386 = arith.addf %373, %385 : vector<16x16xf32>
    %c98 = arith.constant 98 : index
    %387 = memref.load %arg5[%c98] : memref<108xf32, #tpu.memory_space<smem>>
    %388 = vector.broadcast %387 : f32 to vector<16x16xf32>
    %389 = arith.mulf %388, %378 : vector<16x16xf32>
    %390 = arith.addf %377, %389 : vector<16x16xf32>
    %391 = vector.extract_strided_slice %18 {offsets = [3, 0, 0], sizes = [1, 18, 16], strides = [1, 1, 1]} : vector<4x18x18xf32> to vector<1x18x16xf32>
    %392 = vector.shape_cast %391 : vector<1x18x16xf32> to vector<18x16xf32>
    %393 = vector.extract_strided_slice %18 {offsets = [3, 0, 1], sizes = [1, 18, 16], strides = [1, 1, 1]} : vector<4x18x18xf32> to vector<1x18x16xf32>
    %394 = vector.shape_cast %393 : vector<1x18x16xf32> to vector<18x16xf32>
    %395 = vector.extract_strided_slice %18 {offsets = [3, 0, 2], sizes = [1, 18, 16], strides = [1, 1, 1]} : vector<4x18x18xf32> to vector<1x18x16xf32>
    %396 = vector.shape_cast %395 : vector<1x18x16xf32> to vector<18x16xf32>
    %397 = vector.extract_strided_slice %392 {offsets = [0, 0], sizes = [16, 16], strides = [1, 1]} : vector<18x16xf32> to vector<16x16xf32>
    %c27 = arith.constant 27 : index
    %398 = memref.load %arg5[%c27] : memref<108xf32, #tpu.memory_space<smem>>
    %399 = vector.broadcast %398 : f32 to vector<16x16xf32>
    %400 = arith.mulf %399, %397 : vector<16x16xf32>
    %401 = arith.addf %382, %400 : vector<16x16xf32>
    %c63 = arith.constant 63 : index
    %402 = memref.load %arg5[%c63] : memref<108xf32, #tpu.memory_space<smem>>
    %403 = vector.broadcast %402 : f32 to vector<16x16xf32>
    %404 = arith.mulf %403, %397 : vector<16x16xf32>
    %405 = arith.addf %386, %404 : vector<16x16xf32>
    %c99 = arith.constant 99 : index
    %406 = memref.load %arg5[%c99] : memref<108xf32, #tpu.memory_space<smem>>
    %407 = vector.broadcast %406 : f32 to vector<16x16xf32>
    %408 = arith.mulf %407, %397 : vector<16x16xf32>
    %409 = arith.addf %390, %408 : vector<16x16xf32>
    %410 = vector.extract_strided_slice %394 {offsets = [0, 0], sizes = [16, 16], strides = [1, 1]} : vector<18x16xf32> to vector<16x16xf32>
    %c28 = arith.constant 28 : index
    %411 = memref.load %arg5[%c28] : memref<108xf32, #tpu.memory_space<smem>>
    %412 = vector.broadcast %411 : f32 to vector<16x16xf32>
    %413 = arith.mulf %412, %410 : vector<16x16xf32>
    %414 = arith.addf %401, %413 : vector<16x16xf32>
    %c64 = arith.constant 64 : index
    %415 = memref.load %arg5[%c64] : memref<108xf32, #tpu.memory_space<smem>>
    %416 = vector.broadcast %415 : f32 to vector<16x16xf32>
    %417 = arith.mulf %416, %410 : vector<16x16xf32>
    %418 = arith.addf %405, %417 : vector<16x16xf32>
    %c100 = arith.constant 100 : index
    %419 = memref.load %arg5[%c100] : memref<108xf32, #tpu.memory_space<smem>>
    %420 = vector.broadcast %419 : f32 to vector<16x16xf32>
    %421 = arith.mulf %420, %410 : vector<16x16xf32>
    %422 = arith.addf %409, %421 : vector<16x16xf32>
    %423 = vector.extract_strided_slice %396 {offsets = [0, 0], sizes = [16, 16], strides = [1, 1]} : vector<18x16xf32> to vector<16x16xf32>
    %c29 = arith.constant 29 : index
    %424 = memref.load %arg5[%c29] : memref<108xf32, #tpu.memory_space<smem>>
    %425 = vector.broadcast %424 : f32 to vector<16x16xf32>
    %426 = arith.mulf %425, %423 : vector<16x16xf32>
    %427 = arith.addf %414, %426 : vector<16x16xf32>
    %c65 = arith.constant 65 : index
    %428 = memref.load %arg5[%c65] : memref<108xf32, #tpu.memory_space<smem>>
    %429 = vector.broadcast %428 : f32 to vector<16x16xf32>
    %430 = arith.mulf %429, %423 : vector<16x16xf32>
    %431 = arith.addf %418, %430 : vector<16x16xf32>
    %c101 = arith.constant 101 : index
    %432 = memref.load %arg5[%c101] : memref<108xf32, #tpu.memory_space<smem>>
    %433 = vector.broadcast %432 : f32 to vector<16x16xf32>
    %434 = arith.mulf %433, %423 : vector<16x16xf32>
    %435 = arith.addf %422, %434 : vector<16x16xf32>
    %436 = vector.extract_strided_slice %392 {offsets = [1, 0], sizes = [16, 16], strides = [1, 1]} : vector<18x16xf32> to vector<16x16xf32>
    %c30 = arith.constant 30 : index
    %437 = memref.load %arg5[%c30] : memref<108xf32, #tpu.memory_space<smem>>
    %438 = vector.broadcast %437 : f32 to vector<16x16xf32>
    %439 = arith.mulf %438, %436 : vector<16x16xf32>
    %440 = arith.addf %427, %439 : vector<16x16xf32>
    %c66 = arith.constant 66 : index
    %441 = memref.load %arg5[%c66] : memref<108xf32, #tpu.memory_space<smem>>
    %442 = vector.broadcast %441 : f32 to vector<16x16xf32>
    %443 = arith.mulf %442, %436 : vector<16x16xf32>
    %444 = arith.addf %431, %443 : vector<16x16xf32>
    %c102 = arith.constant 102 : index
    %445 = memref.load %arg5[%c102] : memref<108xf32, #tpu.memory_space<smem>>
    %446 = vector.broadcast %445 : f32 to vector<16x16xf32>
    %447 = arith.mulf %446, %436 : vector<16x16xf32>
    %448 = arith.addf %435, %447 : vector<16x16xf32>
    %449 = vector.extract_strided_slice %394 {offsets = [1, 0], sizes = [16, 16], strides = [1, 1]} : vector<18x16xf32> to vector<16x16xf32>
    %c31 = arith.constant 31 : index
    %450 = memref.load %arg5[%c31] : memref<108xf32, #tpu.memory_space<smem>>
    %451 = vector.broadcast %450 : f32 to vector<16x16xf32>
    %452 = arith.mulf %451, %449 : vector<16x16xf32>
    %453 = arith.addf %440, %452 : vector<16x16xf32>
    %c67 = arith.constant 67 : index
    %454 = memref.load %arg5[%c67] : memref<108xf32, #tpu.memory_space<smem>>
    %455 = vector.broadcast %454 : f32 to vector<16x16xf32>
    %456 = arith.mulf %455, %449 : vector<16x16xf32>
    %457 = arith.addf %444, %456 : vector<16x16xf32>
    %c103 = arith.constant 103 : index
    %458 = memref.load %arg5[%c103] : memref<108xf32, #tpu.memory_space<smem>>
    %459 = vector.broadcast %458 : f32 to vector<16x16xf32>
    %460 = arith.mulf %459, %449 : vector<16x16xf32>
    %461 = arith.addf %448, %460 : vector<16x16xf32>
    %462 = vector.extract_strided_slice %396 {offsets = [1, 0], sizes = [16, 16], strides = [1, 1]} : vector<18x16xf32> to vector<16x16xf32>
    %c32 = arith.constant 32 : index
    %463 = memref.load %arg5[%c32] : memref<108xf32, #tpu.memory_space<smem>>
    %464 = vector.broadcast %463 : f32 to vector<16x16xf32>
    %465 = arith.mulf %464, %462 : vector<16x16xf32>
    %466 = arith.addf %453, %465 : vector<16x16xf32>
    %c68 = arith.constant 68 : index
    %467 = memref.load %arg5[%c68] : memref<108xf32, #tpu.memory_space<smem>>
    %468 = vector.broadcast %467 : f32 to vector<16x16xf32>
    %469 = arith.mulf %468, %462 : vector<16x16xf32>
    %470 = arith.addf %457, %469 : vector<16x16xf32>
    %c104 = arith.constant 104 : index
    %471 = memref.load %arg5[%c104] : memref<108xf32, #tpu.memory_space<smem>>
    %472 = vector.broadcast %471 : f32 to vector<16x16xf32>
    %473 = arith.mulf %472, %462 : vector<16x16xf32>
    %474 = arith.addf %461, %473 : vector<16x16xf32>
    %475 = vector.extract_strided_slice %392 {offsets = [2, 0], sizes = [16, 16], strides = [1, 1]} : vector<18x16xf32> to vector<16x16xf32>
    %c33 = arith.constant 33 : index
    %476 = memref.load %arg5[%c33] : memref<108xf32, #tpu.memory_space<smem>>
    %477 = vector.broadcast %476 : f32 to vector<16x16xf32>
    %478 = arith.mulf %477, %475 : vector<16x16xf32>
    %479 = arith.addf %466, %478 : vector<16x16xf32>
    %c69 = arith.constant 69 : index
    %480 = memref.load %arg5[%c69] : memref<108xf32, #tpu.memory_space<smem>>
    %481 = vector.broadcast %480 : f32 to vector<16x16xf32>
    %482 = arith.mulf %481, %475 : vector<16x16xf32>
    %483 = arith.addf %470, %482 : vector<16x16xf32>
    %c105 = arith.constant 105 : index
    %484 = memref.load %arg5[%c105] : memref<108xf32, #tpu.memory_space<smem>>
    %485 = vector.broadcast %484 : f32 to vector<16x16xf32>
    %486 = arith.mulf %485, %475 : vector<16x16xf32>
    %487 = arith.addf %474, %486 : vector<16x16xf32>
    %488 = vector.extract_strided_slice %394 {offsets = [2, 0], sizes = [16, 16], strides = [1, 1]} : vector<18x16xf32> to vector<16x16xf32>
    %c34 = arith.constant 34 : index
    %489 = memref.load %arg5[%c34] : memref<108xf32, #tpu.memory_space<smem>>
    %490 = vector.broadcast %489 : f32 to vector<16x16xf32>
    %491 = arith.mulf %490, %488 : vector<16x16xf32>
    %492 = arith.addf %479, %491 : vector<16x16xf32>
    %c70 = arith.constant 70 : index
    %493 = memref.load %arg5[%c70] : memref<108xf32, #tpu.memory_space<smem>>
    %494 = vector.broadcast %493 : f32 to vector<16x16xf32>
    %495 = arith.mulf %494, %488 : vector<16x16xf32>
    %496 = arith.addf %483, %495 : vector<16x16xf32>
    %c106 = arith.constant 106 : index
    %497 = memref.load %arg5[%c106] : memref<108xf32, #tpu.memory_space<smem>>
    %498 = vector.broadcast %497 : f32 to vector<16x16xf32>
    %499 = arith.mulf %498, %488 : vector<16x16xf32>
    %500 = arith.addf %487, %499 : vector<16x16xf32>
    %501 = vector.extract_strided_slice %396 {offsets = [2, 0], sizes = [16, 16], strides = [1, 1]} : vector<18x16xf32> to vector<16x16xf32>
    %c35 = arith.constant 35 : index
    %502 = memref.load %arg5[%c35] : memref<108xf32, #tpu.memory_space<smem>>
    %503 = vector.broadcast %502 : f32 to vector<16x16xf32>
    %504 = arith.mulf %503, %501 : vector<16x16xf32>
    %505 = arith.addf %492, %504 : vector<16x16xf32>
    %c71 = arith.constant 71 : index
    %506 = memref.load %arg5[%c71] : memref<108xf32, #tpu.memory_space<smem>>
    %507 = vector.broadcast %506 : f32 to vector<16x16xf32>
    %508 = arith.mulf %507, %501 : vector<16x16xf32>
    %509 = arith.addf %496, %508 : vector<16x16xf32>
    %c107 = arith.constant 107 : index
    %510 = memref.load %arg5[%c107] : memref<108xf32, #tpu.memory_space<smem>>
    %511 = vector.broadcast %510 : f32 to vector<16x16xf32>
    %512 = arith.mulf %511, %501 : vector<16x16xf32>
    %513 = arith.addf %500, %512 : vector<16x16xf32>
    %514 = math.tanh %505 : vector<16x16xf32>
    %c0_16 = arith.constant 0 : index
    %c0_17 = arith.constant 0 : index
    %c0_18 = arith.constant 0 : index
    %c0_19 = arith.constant 0 : index
    %515 = vector.load %arg6[%c0_16, %c0_17, %c0_18, %c0_19] : memref<1x3x16x16xf32, #tpu.memory_space<vmem>>, vector<1x1x16x16xf32>
    %516 = vector.shape_cast %515 : vector<1x1x16x16xf32> to vector<16x16xf32>
    %517 = vector.shape_cast %514 : vector<16x16xf32> to vector<1x1x16x16xf32>
    tpu.vector_store %arg6[%c0_16, %c0_17, %c0_18, %c0_19], %517 {strides = array<i32>} : memref<1x3x16x16xf32, #tpu.memory_space<vmem>>, vector<1x1x16x16xf32>,
    %518 = math.tanh %509 : vector<16x16xf32>
    %c0_20 = arith.constant 0 : index
    %c1_21 = arith.constant 1 : index
    %c0_22 = arith.constant 0 : index
    %c0_23 = arith.constant 0 : index
    %519 = vector.load %arg6[%c0_20, %c1_21, %c0_22, %c0_23] : memref<1x3x16x16xf32, #tpu.memory_space<vmem>>, vector<1x1x16x16xf32>
    %520 = vector.shape_cast %519 : vector<1x1x16x16xf32> to vector<16x16xf32>
    %521 = vector.shape_cast %518 : vector<16x16xf32> to vector<1x1x16x16xf32>
    tpu.vector_store %arg6[%c0_20, %c1_21, %c0_22, %c0_23], %521 {strides = array<i32>} : memref<1x3x16x16xf32, #tpu.memory_space<vmem>>, vector<1x1x16x16xf32>,
    %522 = math.tanh %513 : vector<16x16xf32>
    %c0_24 = arith.constant 0 : index
    %c2_25 = arith.constant 2 : index
    %c0_26 = arith.constant 0 : index
    %c0_27 = arith.constant 0 : index
    %523 = vector.load %arg6[%c0_24, %c2_25, %c0_26, %c0_27] : memref<1x3x16x16xf32, #tpu.memory_space<vmem>>, vector<1x1x16x16xf32>
    %524 = vector.shape_cast %523 : vector<1x1x16x16xf32> to vector<16x16xf32>
    %525 = vector.shape_cast %522 : vector<16x16xf32> to vector<1x1x16x16xf32>
    tpu.vector_store %arg6[%c0_24, %c2_25, %c0_26, %c0_27], %525 {strides = array<i32>} : memref<1x3x16x16xf32, #tpu.memory_space<vmem>>, vector<1x1x16x16xf32>,
    return
  }
  func.func @transform_0(%arg0: i32, %arg1: i32) -> (i32, i32, i32, i32) {
    %c0_i32 = arith.constant 0 : i32
    %c0_i32_0 = arith.constant 0 : i32
    %c0_i32_1 = arith.constant 0 : i32
    return %arg0, %c0_i32, %arg1, %c0_i32_0 : i32, i32, i32, i32
  }
  func.func @transform_1(%arg0: i32, %arg1: i32) -> (i32, i32, i32, i32) {
    %c2_i32 = arith.constant 2 : i32
    %0 = arith.muli %arg1, %c2_i32 : i32
    %c1_i32 = arith.constant 1 : i32
    %1 = arith.subi %0, %c1_i32 : i32
    %c0_i32 = arith.constant 0 : i32
    %2 = arith.maxsi %1, %c0_i32 : i32
    %c0_i32_0 = arith.constant 0 : i32
    %c0_i32_1 = arith.constant 0 : i32
    %c0_i32_2 = arith.constant 0 : i32
    return %arg0, %c0_i32_0, %2, %c0_i32_1 : i32, i32, i32, i32
  }
  func.func @transform_2(%arg0: i32, %arg1: i32) -> (i32, i32, i32, i32) {
    %c1_i32 = arith.constant 1 : i32
    %0 = arith.addi %arg1, %c1_i32 : i32
    %c2_i32 = arith.constant 2 : i32
    %1 = arith.muli %0, %c2_i32 : i32
    %c1_i32_0 = arith.constant 1 : i32
    %2 = arith.minsi %1, %c1_i32_0 : i32
    %c0_i32 = arith.constant 0 : i32
    %c0_i32_1 = arith.constant 0 : i32
    %c0_i32_2 = arith.constant 0 : i32
    return %arg0, %c0_i32, %2, %c0_i32_1 : i32, i32, i32, i32
  }
  func.func @transform_3(%arg0: i32, %arg1: i32) -> i32 {
    %c0_i32 = arith.constant 0 : i32
    %c0_i32_0 = arith.constant 0 : i32
    return %c0_i32 : i32
  }
  func.func @transform_4(%arg0: i32, %arg1: i32) -> (i32, i32, i32, i32) {
    %c0_i32 = arith.constant 0 : i32
    %c0_i32_0 = arith.constant 0 : i32
    %c0_i32_1 = arith.constant 0 : i32
    return %arg0, %c0_i32, %arg1, %c0_i32_0 : i32, i32, i32, i32
  }
}

</mosaic_0001>

<llo_original>
// kernel: tpu_custom_call.1
$region0: #{tpu_custom_call.1}
  #allocation0 [shape = 'u32[]', space=smem, size = 0x4, offset = 0x4, fixed_abs, tag = 'smem constant byte address 0x4 - core index']
  #allocation1 [shape = 'u32[144,128]{1,0:T(1,128)}', space=vmem, size = 0x12000, scoped, tag = 'internal scratch']
  %s0 = inlined_call_operand.hbm [shape: f32[2,4,16,16], index: 0, kind: input, shape index: {}]
  %s1 = inlined_call_operand.hbm [shape: f32[2,4,16,16], index: 1, kind: input, shape index: {}]
  %s2 = inlined_call_operand.hbm [shape: f32[2,4,16,16], index: 2, kind: input, shape index: {}]
  %s3 = inlined_call_operand.vmem [shape: f32[108], index: 3, kind: input, shape index: {}]
  %s4 = inlined_call_operand.hbm [shape: f32[2,3,16,16], index: 4, kind: output, shape index: {}]
  %s5 = sld [smem:[#allocation0]]
  $region65: #{tpu_custom_call.1} parent=0
    _
  %s7 = ssub.s32 1, %s5
  %s8 = scalar_select 0, %s7, %s5
  $region1: #{tpu_custom_call.1} parent=0
    #allocation2 [shape = 'u8[65536]{0}', space=vmem, size = 0x10000, scoped, tag = 'input window, operand 0']
    #allocation3 [shape = 's32[2]{0}', space=sflag, size = 0x8, scoped, tag = 'scoped memory for tpu_custom_call.1']
    #allocation4 [shape = 's32[2]{0}', space=sflag, size = 0x8, scoped, tag = 'scoped memory for tpu_custom_call.1']
    #allocation5 [shape = 's32[2]{0}', space=sflag, size = 0x8, scoped, tag = 'scoped memory for tpu_custom_call.1']
    #allocation6 [shape = 'u8[32768]{0}', space=vmem, size = 0x8000, scoped, tag = 'input window, operand 1']
    #allocation7 [shape = 's32[2]{0}', space=sflag, size = 0x8, scoped, tag = 'scoped memory for tpu_custom_call.1']
    #allocation8 [shape = 'u8[32768]{0}', space=vmem, size = 0x8000, scoped, tag = 'input window, operand 2']
    #allocation9 [shape = 'u8[512]{0}', space=smem, size = 0x200, scoped, tag = 'input window, operand 3, single buffered']
    #allocation10 [shape = 'u8[49152]{0}', space=vmem, size = 0xc000, scoped, tag = 'output window, operand 0']
    %9 = vsyncpa [#allocation3], 0
    %s10 = scalar_lea.sflag [#allocation3], 1
    %11 = vsyncpa %s10, 0
    %12 = vsyncpa [#allocation7], 0
    %s13 = scalar_lea.sflag [#allocation7], 1
    %14 = vsyncpa %s13, 0
    %15 = vsyncpa [#allocation5], 0
    %16 = vsyncpa [#allocation4], 0
    %s17 = scalar_lea.sflag [#allocation4], 1
    %18 = vsyncpa %s17, 0
    loop: start=0, step=1, limit=4
    $region2: #{tpu_custom_call.1} parent=1 // loop_pre_header
      _
    $region3: #{tpu_custom_call.1} parent=1 // loop_header
      %s20 = sphi 0, %s24
      %p21 = scmp.ge.s32.totalorder %s20, 4
      %s27 = sphi 0, %s39
      %s28 = sphi 0, %s35
      %s29 = sphi 0, %s27
      %s30 = sphi 0, %s28
      %s31 = sphi 0, %s29
      %s32 = sphi 0, %s30
      %s44 = sphi 0, %s46
      %s47 = sphi 0, %s44
      %s48 = sphi 0, %s47
      %s64 = sphi 0, %s48
      %s80 = sphi 0, %s82
      %s83 = sphi 0, %s80
      %s84 = sphi 0, %s83
      %s100 = sphi 0, %s84
      %s116 = sphi 0, %s118
      %s119 = sphi 0, %s116
      %s120 = sphi 0, %s119
      %s136 = sphi 0, %s120
      %s140 = sphi 0, %s140
      %s142 = sphi 0, %s140
      %s143 = sphi 0, %s142
      %s157 = sphi 0, %s143
      %s165 = sphi 0, %s167
      %s168 = sphi 0, %s165
      %s169 = sphi 0, %s168
      %s185 = sphi 0, %s169
    $region4: #{tpu_custom_call.1} parent=1 // loop_header_branch
      %23 = sbr.rel (%p21) target = $region8
    $region5: #{tpu_custom_call.1} parent=1 // loop_body
      %s25 = ssub.s32 %s20, 1
      %s26 = ssub.s32 %s20, 2
      %s33 = sadd.s32 1, %s28
      %p34 = scmp.ge.s32.totalorder %s33, 1
      %s35 = scalar_select %p34, 0, %s33
      %s36 = sadd.s32 1, %s27
      %s37 = scalar_select %p34, %s36, %s27
      %p38 = scmp.ge.s32.totalorder %s37, 2
      %s39 = scalar_select %p38, 0, %s37
      %s40 = ssub.s32 %s27, %s39
      %s41 = ssub.s32 %s28, %s35
      %s42 = sor.u32 %s40, %s41
      %p43 = scmp.eq.s32.totalorder %s42, 0
      %s45 = sadd.s32 %s44, 1
      %s46 = scalar_select %p43, %s44, %s45
      %p49 = pneg %p43
      %p50 = scmp.eq.s32.totalorder %s20, 1
      %p51 = por %p49, %p50
      %p52 = scmp.ne.s32.totalorder %s44, %s47
      %p53 = scmp.eq.s32.totalorder %s20, 0
      %p54 = por %p52, %p53
      %p55 = scmp.ne.s32.totalorder %s44, %s47
      %p56 = scmp.eq.s32.totalorder %s25, 1
      %p57 = por %p55, %p56
      %p58 = scmp.ne.s32.totalorder %s47, %s48
      %p59 = scmp.eq.s32.totalorder %s25, 0
      %p60 = por %p58, %p59
      %p61 = scmp.ne.s32.totalorder %s47, %s48
      %p62 = scmp.eq.s32.totalorder %s26, 1
      %p63 = por %p61, %p62
      %p65 = scmp.ne.s32.totalorder %s48, %s64
      %p66 = scmp.eq.s32.totalorder %s26, 0
      %p67 = por %p65, %p66
      %s68 = smul.u32 %s28, 2
      %s69 = ssub.s32 %s68, 1
      %p70 = scmp.gt.s32.totalorder %s69, 0
      %s71 = scalar_select %p70, %s69, 0
      %s72 = smul.u32 %s35, 2
      %s73 = ssub.s32 %s72, 1
      %p74 = scmp.gt.s32.totalorder %s73, 0
      %s75 = scalar_select %p74, %s73, 0
      %s76 = ssub.s32 %s27, %s39
      %s77 = ssub.s32 %s71, %s75
      %s78 = sor.u32 %s76, %s77
      %p79 = scmp.eq.s32.totalorder %s78, 0
      %s81 = sadd.s32 %s80, 1
      %s82 = scalar_select %p79, %s80, %s81
      %p85 = pneg %p79
      %p86 = scmp.eq.s32.totalorder %s20, 1
      %p87 = por %p85, %p86
      %p88 = scmp.ne.s32.totalorder %s80, %s83
      %p89 = scmp.eq.s32.totalorder %s20, 0
      %p90 = por %p88, %p89
      %p91 = scmp.ne.s32.totalorder %s80, %s83
      %p92 = scmp.eq.s32.totalorder %s25, 1
      %p93 = por %p91, %p92
      %p94 = scmp.ne.s32.totalorder %s83, %s84
      %p95 = scmp.eq.s32.totalorder %s25, 0
      %p96 = por %p94, %p95
      %p97 = scmp.ne.s32.totalorder %s83, %s84
      %p98 = scmp.eq.s32.totalorder %s26, 1
      %p99 = por %p97, %p98
      %p101 = scmp.ne.s32.totalorder %s84, %s100
      %p102 = scmp.eq.s32.totalorder %s26, 0
      %p103 = por %p101, %p102
      %s104 = sadd.s32 %s28, 1
      %s105 = smul.u32 %s104, 2
      %p106 = scmp.lt.s32.totalorder %s105, 1
      %s107 = scalar_select %p106, %s105, 1
      %s108 = sadd.s32 %s35, 1
      %s109 = smul.u32 %s108, 2
      %p110 = scmp.lt.s32.totalorder %s109, 1
      %s111 = scalar_select %p110, %s109, 1
      %s112 = ssub.s32 %s27, %s39
      %s113 = ssub.s32 %s107, %s111
      %s114 = sor.u32 %s112, %s113
      %p115 = scmp.eq.s32.totalorder %s114, 0
      %s117 = sadd.s32 %s116, 1
      %s118 = scalar_select %p115, %s116, %s117
      %p121 = pneg %p115
      %p122 = scmp.eq.s32.totalorder %s20, 1
      %p123 = por %p121, %p122
      %p124 = scmp.ne.s32.totalorder %s116, %s119
      %p125 = scmp.eq.s32.totalorder %s20, 0
      %p126 = por %p124, %p125
      %p127 = scmp.ne.s32.totalorder %s116, %s119
      %p128 = scmp.eq.s32.totalorder %s25, 1
      %p129 = por %p127, %p128
      %p130 = scmp.ne.s32.totalorder %s119, %s120
      %p131 = scmp.eq.s32.totalorder %s25, 0
      %p132 = por %p130, %p131
      %p133 = scmp.ne.s32.totalorder %s119, %s120
      %p134 = scmp.eq.s32.totalorder %s26, 1
      %p135 = por %p133, %p134
      %p137 = scmp.ne.s32.totalorder %s120, %s136
      %p138 = scmp.eq.s32.totalorder %s26, 0
      %p139 = por %p137, %p138
      %s141 = sadd.s32 %s140, 1
      %p144 = scmp.eq.s32.totalorder %s20, 1
      %p145 = scmp.ne.s32.totalorder %s140, %s142
      %p146 = scmp.eq.s32.totalorder %s20, 0
      %p147 = por %p145, %p146
      %p148 = scmp.ne.s32.totalorder %s140, %s142
      %p149 = scmp.eq.s32.totalorder %s25, 1
      %p150 = por %p148, %p149
      %p151 = scmp.ne.s32.totalorder %s142, %s143
      %p152 = scmp.eq.s32.totalorder %s25, 0
      %p153 = por %p151, %p152
      %p154 = scmp.ne.s32.totalorder %s142, %s143
      %p155 = scmp.eq.s32.totalorder %s26, 1
      %p156 = por %p154, %p155
      %p158 = scmp.ne.s32.totalorder %s143, %s157
      %p159 = scmp.eq.s32.totalorder %s26, 0
      %p160 = por %p158, %p159
      %s161 = ssub.s32 %s27, %s39
      %s162 = ssub.s32 %s28, %s35
      %s163 = sor.u32 %s161, %s162
      %p164 = scmp.eq.s32.totalorder %s163, 0
      %s166 = sadd.s32 %s165, 1
      %s167 = scalar_select %p164, %s165, %s166
      %p170 = pneg %p164
      %p171 = scmp.eq.s32.totalorder %s20, 1
      %p172 = por %p170, %p171
      %p173 = scmp.ne.s32.totalorder %s165, %s168
      %p174 = scmp.eq.s32.totalorder %s20, 0
      %p175 = por %p173, %p174
      %p176 = scmp.ne.s32.totalorder %s165, %s168
      %p177 = scmp.eq.s32.totalorder %s25, 1
      %p178 = por %p176, %p177
      %p179 = scmp.ne.s32.totalorder %s168, %s169
      %p180 = scmp.eq.s32.totalorder %s25, 0
      %p181 = por %p179, %p180
      %p182 = scmp.ne.s32.totalorder %s168, %s169
      %p183 = scmp.eq.s32.totalorder %s26, 1
      %p184 = por %p182, %p183
      %p186 = scmp.ne.s32.totalorder %s169, %s185
      %p187 = scmp.eq.s32.totalorder %s26, 0
      %p188 = por %p186, %p187
      %p189 = scmp.le.s32.totalorder 1, %s20
      %p190 = scmp.lt.s32.totalorder %s20, 3
      %p191 = pnand %p189, %p190
      %p192 = pneg %p191
      // Predicated region
      $region9: #{tpu_custom_call.1} parent=5 // pred_check
        _
      $region10: #{tpu_custom_call.1} parent=5 // pred_check_branch
        %194 = sbr.rel (%p191) target = $region12
      $region11: #{tpu_custom_call.1} parent=5 // pred_region
        %s195 = ssub.s32 %s20, 1
        // Predicated region
        $region13: #{tpu_custom_call.1} parent=11 // pred_check
          %p196 = pneg %p153
        $region14: #{tpu_custom_call.1} parent=11 // pred_check_branch
          %198 = sbr.rel (%p196) target = $region16
        $region15: #{tpu_custom_call.1} parent=11 // pred_region
          %s200 = ssub.s32 16, 16
          %201 = vsyncadd [#allocation5], %s200
          %s203 = sshll.u32 %s3, 4
          %s204 = int_to_ptr.vmem [resolvable:$true] %s203
          %206 = dma.vmem_to_smem %s204, 16, [#allocation9], [#allocation5]
        $region16: #{tpu_custom_call.1} parent=11 // pred_fallthru
          _
      $region12: #{tpu_custom_call.1} parent=5 // pred_fallthru
        _
      %p207 = scmp.lt.s32.totalorder %s20, 2
      // Predicated region
      $region17: #{tpu_custom_call.1} parent=5 // pred_check
        %p208 = pneg %p207
      $region18: #{tpu_custom_call.1} parent=5 // pred_check_branch
        %210 = sbr.rel (%p208) target = $region20
      $region19: #{tpu_custom_call.1} parent=5 // pred_region
        // Predicated region
        $region21: #{tpu_custom_call.1} parent=19 // pred_check
          %p211 = pneg %p54
        $region22: #{tpu_custom_call.1} parent=19 // pred_check_branch
          %213 = sbr.rel (%p211) target = $region24
        $region23: #{tpu_custom_call.1} parent=19 // pred_region
          %s214 = sand.u32 %s44, 1
          %s215 = scalar_lea.sflag [#allocation3], %s214
          %s216 = sand.u32 %s44, 1
          %s217 = smul.addr %s216, 64
          %s218 = scalar_lea.vmem [#allocation2], %s217
          %s219 = smul.u32 2, %s28
          %s221 = ssub.s32 1024, 1024
          %222 = vsyncadd %s215, %s221
          %s223 = smul.addr %s27, 8
          %s224 = sadd.s32 %s219, %s223
          %s225 = smul.addr %s224, 128
          %s226 = scalar_lea.hbm %s0, %s225
          %s227 = sshll.u32 %s218, 4
          %s228 = int_to_ptr.vmem [resolvable:$true] %s227
          %233 = dma.hbm_to_vmem [thread:$0]  %s226, 1024, %s228, %s215, 128, 128, 8
        $region24: #{tpu_custom_call.1} parent=19 // pred_fallthru
          _
        // Predicated region
        $region25: #{tpu_custom_call.1} parent=19 // pred_check
          %p234 = pneg %p90
        $region26: #{tpu_custom_call.1} parent=19 // pred_check_branch
          %236 = sbr.rel (%p234) target = $region28
        $region27: #{tpu_custom_call.1} parent=19 // pred_region
          %s237 = sand.u32 %s20, 1
          %s238 = scalar_lea.sflag [#allocation7], %s237
          %s239 = sand.u32 %s80, 1
          %s240 = smul.addr %s239, 32
          %s241 = scalar_lea.vmem [#allocation6], %s240
          %s242 = smul.u32 %s28, 2
          %s243 = ssub.s32 %s242, 1
          %p244 = scmp.gt.s32.totalorder %s243, 0
          %s245 = scalar_select %p244, %s243, 0
          %s247 = ssub.s32 512, 512
          %248 = vsyncadd %s238, %s247
          %s249 = smul.addr %s27, 8
          %s250 = sadd.s32 %s245, %s249
          %s251 = smul.addr %s250, 128
          %s252 = scalar_lea.hbm %s1, %s251
          %s253 = sshll.u32 %s241, 4
          %s254 = int_to_ptr.vmem [resolvable:$true] %s253
          %259 = dma.hbm_to_vmem [thread:$0]  %s252, 512, %s254, %s238, 256, 128, 8
        $region28: #{tpu_custom_call.1} parent=19 // pred_fallthru
          _
        // Predicated region
        $region29: #{tpu_custom_call.1} parent=19 // pred_check
          %p260 = pneg %p126
        $region30: #{tpu_custom_call.1} parent=19 // pred_check_branch
          %262 = sbr.rel (%p260) target = $region32
        $region31: #{tpu_custom_call.1} parent=19 // pred_region
          %s263 = sand.u32 %s20, 1
          %s264 = scalar_lea.sflag [#allocation7], %s263
          %s265 = sand.u32 %s116, 1
          %s266 = smul.addr %s265, 32
          %s267 = scalar_lea.vmem [#allocation8], %s266
          %s268 = sadd.s32 %s28, 1
          %s269 = smul.u32 %s268, 2
          %p270 = scmp.lt.s32.totalorder %s269, 1
          %s271 = scalar_select %p270, %s269, 1
          %s273 = ssub.s32 512, 512
          %274 = vsyncadd %s264, %s273
          %s275 = smul.addr %s27, 8
          %s276 = sadd.s32 %s271, %s275
          %s277 = smul.addr %s276, 128
          %s278 = scalar_lea.hbm %s2, %s277
          %s279 = sshll.u32 %s267, 4
          %s280 = int_to_ptr.vmem [resolvable:$true] %s279
          %285 = dma.hbm_to_vmem [thread:$0]  %s278, 512, %s280, %s264, 256, 128, 8
        $region32: #{tpu_custom_call.1} parent=19 // pred_fallthru
          _
      $region20: #{tpu_custom_call.1} parent=5 // pred_fallthru
        _
      %p286 = scmp.le.s32.totalorder 1, %s20
      %p287 = scmp.lt.s32.totalorder %s20, 3
      %p288 = pnand %p286, %p287
      %p289 = pneg %p288
      // Predicated region
      $region33: #{tpu_custom_call.1} parent=5 // pred_check
        _
      $region34: #{tpu_custom_call.1} parent=5 // pred_check_branch
        %291 = sbr.rel (%p288) target = $region36
      $region35: #{tpu_custom_call.1} parent=5 // pred_region
        %s292 = ssub.s32 %s20, 1
        %s293 = sand.u32 %s47, 1
        %s294 = scalar_lea.sflag [#allocation3], %s293
        %s295 = sand.u32 %s47, 1
        %s296 = smul.addr %s295, 64
        %s297 = scalar_lea.vmem [#allocation2], %s296
        // Predicated region
        $region37: #{tpu_custom_call.1} parent=35 // pred_check
          %p298 = pneg %p60
        $region38: #{tpu_custom_call.1} parent=35 // pred_check_branch
          %300 = sbr.rel (%p298) target = $region40
        $region39: #{tpu_custom_call.1} parent=35 // pred_region
          %301 = dma.done %s294, 1024
        $region40: #{tpu_custom_call.1} parent=35 // pred_fallthru
          _
        %s302 = sand.u32 %s25, 1
        %s303 = scalar_lea.sflag [#allocation7], %s302
        %s304 = sand.u32 %s83, 1
        %s305 = smul.addr %s304, 32
        %s306 = scalar_lea.vmem [#allocation6], %s305
        // Predicated region
        $region41: #{tpu_custom_call.1} parent=35 // pred_check
          %p307 = pneg %p96
        $region42: #{tpu_custom_call.1} parent=35 // pred_check_branch
          %309 = sbr.rel (%p307) target = $region44
        $region43: #{tpu_custom_call.1} parent=35 // pred_region
          %310 = dma.done %s303, 512
        $region44: #{tpu_custom_call.1} parent=35 // pred_fallthru
          _
        %s311 = sand.u32 %s25, 1
        %s312 = scalar_lea.sflag [#allocation7], %s311
        %s313 = sand.u32 %s119, 1
        %s314 = smul.addr %s313, 32
        %s315 = scalar_lea.vmem [#allocation8], %s314
        // Predicated region
        $region45: #{tpu_custom_call.1} parent=35 // pred_check
          %p316 = pneg %p132
        $region46: #{tpu_custom_call.1} parent=35 // pred_check_branch
          %318 = sbr.rel (%p316) target = $region48
        $region47: #{tpu_custom_call.1} parent=35 // pred_region
          %319 = dma.done %s312, 512
        $region48: #{tpu_custom_call.1} parent=35 // pred_fallthru
          _
        // Predicated region
        $region49: #{tpu_custom_call.1} parent=35 // pred_check
          %p320 = pneg %p153
        $region50: #{tpu_custom_call.1} parent=35 // pred_check_branch
          %322 = sbr.rel (%p320) target = $region52
        $region51: #{tpu_custom_call.1} parent=35 // pred_region
          %323 = dma.done [#allocation5], 16
        $region52: #{tpu_custom_call.1} parent=35 // pred_fallthru
          _
        %324 = sfence
        %s325 = sand.u32 %s47, 1
        %s326 = scalar_lea.sflag [#allocation3], %s325
        %s327 = sand.u32 %s47, 1
        %s328 = smul.addr %s327, 64
        %s329 = scalar_lea.vmem [#allocation2], %s328
        %p330 = pneg %p60
        %p331 = pneg %p57
        %s332 = sand.u32 %s25, 1
        %s333 = scalar_lea.sflag [#allocation7], %s332
        %s334 = sand.u32 %s83, 1
        %s335 = smul.addr %s334, 32
        %s336 = scalar_lea.vmem [#allocation6], %s335
        %p337 = pneg %p96
        %p338 = pneg %p93
        %s339 = sand.u32 %s25, 1
        %s340 = scalar_lea.sflag [#allocation7], %s339
        %s341 = sand.u32 %s119, 1
        %s342 = smul.addr %s341, 32
        %s343 = scalar_lea.vmem [#allocation8], %s342
        %p344 = pneg %p132
        %p345 = pneg %p129
        %p346 = pneg %p153
        %p347 = pneg %p150
        %p348 = pneg %p181
        %p349 = pneg %p178
        %s350 = sand.u32 %s168, 1
        %s351 = scalar_lea.sflag [#allocation4], %s350
        %s352 = sand.u32 %s168, 1
        %s353 = smul.addr %s352, 48
        %s354 = scalar_lea.vmem [#allocation10], %s353
        %s355 = smul.u32 2, %s30
        %s356 = smul.u32 %s30, 2
        %s357 = ssub.s32 %s356, 1
        %p358 = scmp.gt.s32.totalorder %s357, 0
        %s359 = scalar_select %p358, %s357, 0
        %s360 = sadd.s32 %s30, 1
        %s361 = smul.u32 %s360, 2
        %p362 = scmp.lt.s32.totalorder %s361, 1
        %s363 = scalar_select %p362, %s361, 1
        %s364 = smul.u32 2, %s30
        %v365 = vld [vmem:[%s297] sm:$0xff]
        %v366 = vld [vmem:[%s297 + $0x8] sm:$0xff]
        %v367 = vld [vmem:[%s297 + $0x10] sm:$0xff]
        %v368 = vld [vmem:[%s297 + $0x18] sm:$0xff]
        %v369 = vld [vmem:[%s297 + $0x20] sm:$0xff]
        %v370 = vld [vmem:[%s297 + $0x28] sm:$0xff]
        %v371 = vld [vmem:[%s297 + $0x30] sm:$0xff]
        %v372 = vld [vmem:[%s297 + $0x38] sm:$0xff]
        %v373 = vld [vmem:[%s306 + $0x7] sm:$0x1]
        %v374 = vld [vmem:[%s306 + $0xf] sm:$0x1]
        %v375 = vld [vmem:[%s306 + $0x17] sm:$0x1]
        %v376 = vld [vmem:[%s306 + $0x1f] sm:$0x1]
        %v377 = vld [vmem:[%s315] sm:$0x1]
        %v378 = vld [vmem:[%s315 + $0x8] sm:$0x1]
        %v379 = vld [vmem:[%s315 + $0x10] sm:$0x1]
        %v380 = vld [vmem:[%s315 + $0x18] sm:$0x1]
        %p381 = scmp.gt.s32.totalorder %s30, 0
        %s382 = scalar_select %p381, 1, 0
        %s383 = scvt.s32.f32 %s382
        %v384 = vstv %s383
        %v385 = vmul.f32 %v373, %v384
        %v386 = vmul.f32 %v374, %v384
        %v387 = vmul.f32 %v375, %v384
        %v388 = vmul.f32 %v376, %v384
        %p389 = scmp.lt.s32.totalorder %s30, 0
        %s390 = scalar_select %p389, 1, 0
        %s391 = scvt.s32.f32 %s390
        %v392 = vstv %s391
        %v393 = vmul.f32 %v377, %v392
        %v394 = vmul.f32 %v378, %v392
        %v395 = vmul.f32 %v379, %v392
        %v396 = vmul.f32 %v380, %v392
        %vm405 = vcmask 1040384
        %v406 = vrot.slane %v365, 7
        %v407 = vrot.slane %v366, 7
        %v408 = vsel %vm405, %v406, %v407
        %v409 = vrot.slane %v367, 7
        %v410 = vrot.slane %v368, 7
        %v411 = vsel %vm405, %v409, %v410
        %v412 = vrot.slane %v369, 7
        %v413 = vrot.slane %v370, 7
        %v414 = vsel %vm405, %v412, %v413
        %v415 = vrot.slane %v371, 7
        %v416 = vrot.slane %v372, 7
        %v417 = vsel %vm405, %v415, %v416
        %v430 = vrot.slane %v393, 7
        %v431 = vrot.slane %v394, 7
        %v432 = vrot.slane %v395, 7
        %v433 = vrot.slane %v396, 7
        %v438 = vsel %vm405, %v385, %v406
        %v439 = vsel %vm405, %v386, %v409
        %v440 = vsel %vm405, %v387, %v412
        %v441 = vsel %vm405, %v388, %v415
        %v442 = vsel %vm405, %v407, %v430
        %v443 = vsel %vm405, %v410, %v431
        %v444 = vsel %vm405, %v413, %v432
        %v445 = vsel %vm405, %v416, %v433
        %454 = vrot.lane.b32.xlu0 %v438, 1
        %v455 = vpop.permute.xlu0 %454
        %456 = vrot.lane.b32.xlu0 %v408, 1
        %v457 = vpop.permute.xlu0 %456
        %458 = vrot.lane.b32.xlu0 %v442, 1
        %v459 = vpop.permute.xlu0 %458
        %460 = vrot.lane.b32.xlu0 %v439, 1
        %v461 = vpop.permute.xlu0 %460
        %462 = vrot.lane.b32.xlu0 %v411, 1
        %v463 = vpop.permute.xlu0 %462
        %464 = vrot.lane.b32.xlu0 %v443, 1
        %v465 = vpop.permute.xlu0 %464
        %466 = vrot.lane.b32.xlu0 %v440, 1
        %v467 = vpop.permute.xlu0 %466
        %468 = vrot.lane.b32.xlu0 %v414, 1
        %v469 = vpop.permute.xlu0 %468
        %470 = vrot.lane.b32.xlu0 %v444, 1
        %v471 = vpop.permute.xlu0 %470
        %472 = vrot.lane.b32.xlu0 %v441, 1
        %v473 = vpop.permute.xlu0 %472
        %474 = vrot.lane.b32.xlu0 %v417, 1
        %v475 = vpop.permute.xlu0 %474
        %476 = vrot.lane.b32.xlu0 %v445, 1
        %v477 = vpop.permute.xlu0 %476
        %vm490 = vcmask 7168
        %v491 = vsel %vm490, 0.0, %v455
        %v492 = vsel %vm490, 0.0, %v457
        %v493 = vsel %vm490, 0.0, %v459
        %v494 = vsel %vm490, 0.0, %v461
        %v495 = vsel %vm490, 0.0, %v463
        %v496 = vsel %vm490, 0.0, %v465
        %v497 = vsel %vm490, 0.0, %v467
        %v498 = vsel %vm490, 0.0, %v469
        %v499 = vsel %vm490, 0.0, %v471
        %v500 = vsel %vm490, 0.0, %v473
        %v501 = vsel %vm490, 0.0, %v475
        %v502 = vsel %vm490, 0.0, %v477
        %vm503 = vcmask 138240
        %v504 = vsel %vm503, %v491, 0.0
        %v505 = vsel %vm503, %v492, 0.0
        %v506 = vsel %vm503, %v493, 0.0
        %v507 = vsel %vm503, %v494, 0.0
        %v508 = vsel %vm503, %v495, 0.0
        %v509 = vsel %vm503, %v496, 0.0
        %v510 = vsel %vm503, %v497, 0.0
        %v511 = vsel %vm503, %v498, 0.0
        %v512 = vsel %vm503, %v499, 0.0
        %v513 = vsel %vm503, %v500, 0.0
        %v514 = vsel %vm503, %v501, 0.0
        %v515 = vsel %vm503, %v502, 0.0
        %s516 = sld [smem:[#allocation9]]
        %v517 = vstv %s516
        %v518 = vmul.f32 %v517, %v504
        %v519 = vmul.f32 %v517, %v505
        %v520 = vadd.f32 %v518, 0.0
        %v521 = vadd.f32 %v519, 0.0
        %s522 = sld [smem:[#allocation9 + $0x24]]
        %v523 = vstv %s522
        %v524 = vmul.f32 %v523, %v504
        %v525 = vmul.f32 %v523, %v505
        %v526 = vadd.f32 %v524, 0.0
        %v527 = vadd.f32 %v525, 0.0
        %s528 = sld [smem:[#allocation9 + $0x48]]
        %v529 = vstv %s528
        %v530 = vmul.f32 %v529, %v504
        %v531 = vmul.f32 %v529, %v505
        %v532 = vadd.f32 %v530, 0.0
        %v533 = vadd.f32 %v531, 0.0
        %s534 = sld [smem:[#allocation9 + $0x1]]
        %v535 = vstv %s534
        %v536 = vmul.f32 %v535, %v504
        %v537 = vmul.f32 %v535, %v505
        %540 = vrot.lane.b32.xlu0 %v536, 127
        %v541 = vpop.permute.xlu0 %540
        %542 = vrot.lane.b32.xlu0 %v537, 127
        %v543 = vpop.permute.xlu0 %542
        %v546 = vadd.f32 %v520, %v541
        %v547 = vadd.f32 %v521, %v543
        %s548 = sld [smem:[#allocation9 + $0x25]]
        %v549 = vstv %s548
        %v550 = vmul.f32 %v549, %v504
        %v551 = vmul.f32 %v549, %v505
        %554 = vrot.lane.b32.xlu0 %v550, 127
        %v555 = vpop.permute.xlu0 %554
        %556 = vrot.lane.b32.xlu0 %v551, 127
        %v557 = vpop.permute.xlu0 %556
        %v560 = vadd.f32 %v526, %v555
        %v561 = vadd.f32 %v527, %v557
        %s562 = sld [smem:[#allocation9 + $0x49]]
        %v563 = vstv %s562
        %v564 = vmul.f32 %v563, %v504
        %v565 = vmul.f32 %v563, %v505
        %568 = vrot.lane.b32.xlu0 %v564, 127
        %v569 = vpop.permute.xlu0 %568
        %570 = vrot.lane.b32.xlu0 %v565, 127
        %v571 = vpop.permute.xlu0 %570
        %v574 = vadd.f32 %v532, %v569
        %v575 = vadd.f32 %v533, %v571
        %s576 = sld [smem:[#allocation9 + $0x2]]
        %v577 = vstv %s576
        %v578 = vmul.f32 %v577, %v504
        %v579 = vmul.f32 %v577, %v505
        %582 = vrot.lane.b32.xlu0 %v578, 126
        %v583 = vpop.permute.xlu0 %582
        %584 = vrot.lane.b32.xlu0 %v579, 126
        %v585 = vpop.permute.xlu0 %584
        %v588 = vadd.f32 %v546, %v583
        %v589 = vadd.f32 %v547, %v585
        %s590 = sld [smem:[#allocation9 + $0x26]]
        %v591 = vstv %s590
        %v592 = vmul.f32 %v591, %v504
        %v593 = vmul.f32 %v591, %v505
        %596 = vrot.lane.b32.xlu0 %v592, 126
        %v597 = vpop.permute.xlu0 %596
        %598 = vrot.lane.b32.xlu0 %v593, 126
        %v599 = vpop.permute.xlu0 %598
        %v602 = vadd.f32 %v560, %v597
        %v603 = vadd.f32 %v561, %v599
        %s604 = sld [smem:[#allocation9 + $0x4a]]
        %v605 = vstv %s604
        %v606 = vmul.f32 %v605, %v504
        %v607 = vmul.f32 %v605, %v505
        %610 = vrot.lane.b32.xlu0 %v606, 126
        %v611 = vpop.permute.xlu0 %610
        %612 = vrot.lane.b32.xlu0 %v607, 126
        %v613 = vpop.permute.xlu0 %612
        %v616 = vadd.f32 %v574, %v611
        %v617 = vadd.f32 %v575, %v613
        %s618 = sld [smem:[#allocation9 + $0x3]]
        %v619 = vstv %s618
        %v620 = vmul.f32 %v619, %v504
        %v621 = vmul.f32 %v619, %v505
        %v622 = vmul.f32 %v619, %v506
        %vm626 = vcmask 1046528
        %v627 = vrot.slane %v620, 1
        %v628 = vrot.slane %v621, 1
        %v629 = vsel %vm626, %v627, %v628
        %v630 = vrot.slane %v622, 1
        %v631 = vsel %vm626, %v628, %v630
        %v634 = vadd.f32 %v588, %v629
        %v635 = vadd.f32 %v589, %v631
        %s636 = sld [smem:[#allocation9 + $0x27]]
        %v637 = vstv %s636
        %v638 = vmul.f32 %v637, %v504
        %v639 = vmul.f32 %v637, %v505
        %v640 = vmul.f32 %v637, %v506
        %v644 = vrot.slane %v638, 1
        %v645 = vrot.slane %v639, 1
        %v646 = vsel %vm626, %v644, %v645
        %v647 = vrot.slane %v640, 1
        %v648 = vsel %vm626, %v645, %v647
        %v651 = vadd.f32 %v602, %v646
        %v652 = vadd.f32 %v603, %v648
        %s653 = sld [smem:[#allocation9 + $0x4b]]
        %v654 = vstv %s653
        %v655 = vmul.f32 %v654, %v504
        %v656 = vmul.f32 %v654, %v505
        %v657 = vmul.f32 %v654, %v506
        %v661 = vrot.slane %v655, 1
        %v662 = vrot.slane %v656, 1
        %v663 = vsel %vm626, %v661, %v662
        %v664 = vrot.slane %v657, 1
        %v665 = vsel %vm626, %v662, %v664
        %v668 = vadd.f32 %v616, %v663
        %v669 = vadd.f32 %v617, %v665
        %s670 = sld [smem:[#allocation9 + $0x4]]
        %v671 = vstv %s670
        %v672 = vmul.f32 %v671, %v504
        %v673 = vmul.f32 %v671, %v505
        %v674 = vmul.f32 %v671, %v506
        %v678 = vrot.slane %v672, 1
        %v679 = vrot.slane %v673, 1
        %v680 = vsel %vm626, %v678, %v679
        %v681 = vrot.slane %v674, 1
        %v682 = vsel %vm626, %v679, %v681
        %683 = vrot.lane.b32.xlu0 %v680, 127
        %v684 = vpop.permute.xlu0 %683
        %685 = vrot.lane.b32.xlu0 %v682, 127
        %v686 = vpop.permute.xlu0 %685
        %v689 = vadd.f32 %v634, %v684
        %v690 = vadd.f32 %v635, %v686
        %s691 = sld [smem:[#allocation9 + $0x28]]
        %v692 = vstv %s691
        %v693 = vmul.f32 %v692, %v504
        %v694 = vmul.f32 %v692, %v505
        %v695 = vmul.f32 %v692, %v506
        %v699 = vrot.slane %v693, 1
        %v700 = vrot.slane %v694, 1
        %v701 = vsel %vm626, %v699, %v700
        %v702 = vrot.slane %v695, 1
        %v703 = vsel %vm626, %v700, %v702
        %704 = vrot.lane.b32.xlu0 %v701, 127
        %v705 = vpop.permute.xlu0 %704
        %706 = vrot.lane.b32.xlu0 %v703, 127
        %v707 = vpop.permute.xlu0 %706
        %v710 = vadd.f32 %v651, %v705
        %v711 = vadd.f32 %v652, %v707
        %s712 = sld [smem:[#allocation9 + $0x4c]]
        %v713 = vstv %s712
        %v714 = vmul.f32 %v713, %v504
        %v715 = vmul.f32 %v713, %v505
        %v716 = vmul.f32 %v713, %v506
        %v720 = vrot.slane %v714, 1
        %v721 = vrot.slane %v715, 1
        %v722 = vsel %vm626, %v720, %v721
        %v723 = vrot.slane %v716, 1
        %v724 = vsel %vm626, %v721, %v723
        %725 = vrot.lane.b32.xlu0 %v722, 127
        %v726 = vpop.permute.xlu0 %725
        %727 = vrot.lane.b32.xlu0 %v724, 127
        %v728 = vpop.permute.xlu0 %727
        %v731 = vadd.f32 %v668, %v726
        %v732 = vadd.f32 %v669, %v728
        %s733 = sld [smem:[#allocation9 + $0x5]]
        %v734 = vstv %s733
        %v735 = vmul.f32 %v734, %v504
        %v736 = vmul.f32 %v734, %v505
        %v737 = vmul.f32 %v734, %v506
        %v741 = vrot.slane %v735, 1
        %v742 = vrot.slane %v736, 1
        %v743 = vsel %vm626, %v741, %v742
        %v744 = vrot.slane %v737, 1
        %v745 = vsel %vm626, %v742, %v744
        %746 = vrot.lane.b32.xlu0 %v743, 126
        %v747 = vpop.permute.xlu0 %746
        %748 = vrot.lane.b32.xlu0 %v745, 126
        %v749 = vpop.permute.xlu0 %748
        %v752 = vadd.f32 %v689, %v747
        %v753 = vadd.f32 %v690, %v749
        %s754 = sld [smem:[#allocation9 + $0x29]]
        %v755 = vstv %s754
        %v756 = vmul.f32 %v755, %v504
        %v757 = vmul.f32 %v755, %v505
        %v758 = vmul.f32 %v755, %v506
        %v762 = vrot.slane %v756, 1
        %v763 = vrot.slane %v757, 1
        %v764 = vsel %vm626, %v762, %v763
        %v765 = vrot.slane %v758, 1
        %v766 = vsel %vm626, %v763, %v765
        %767 = vrot.lane.b32.xlu0 %v764, 126
        %v768 = vpop.permute.xlu0 %767
        %769 = vrot.lane.b32.xlu0 %v766, 126
        %v770 = vpop.permute.xlu0 %769
        %v773 = vadd.f32 %v710, %v768
        %v774 = vadd.f32 %v711, %v770
        %s775 = sld [smem:[#allocation9 + $0x4d]]
        %v776 = vstv %s775
        %v777 = vmul.f32 %v776, %v504
        %v778 = vmul.f32 %v776, %v505
        %v779 = vmul.f32 %v776, %v506
        %v783 = vrot.slane %v777, 1
        %v784 = vrot.slane %v778, 1
        %v785 = vsel %vm626, %v783, %v784
        %v786 = vrot.slane %v779, 1
        %v787 = vsel %vm626, %v784, %v786
        %788 = vrot.lane.b32.xlu0 %v785, 126
        %v789 = vpop.permute.xlu0 %788
        %790 = vrot.lane.b32.xlu0 %v787, 126
        %v791 = vpop.permute.xlu0 %790
        %v794 = vadd.f32 %v731, %v789
        %v795 = vadd.f32 %v732, %v791
        %s796 = sld [smem:[#allocation9 + $0x6]]
        %v797 = vstv %s796
        %v798 = vmul.f32 %v797, %v504
        %v799 = vmul.f32 %v797, %v505
        %v800 = vmul.f32 %v797, %v506
        %vm804 = vcmask 1045504
        %v805 = vrot.slane %v798, 2
        %v806 = vrot.slane %v799, 2
        %v807 = vsel %vm804, %v805, %v806
        %v808 = vrot.slane %v800, 2
        %v809 = vsel %vm804, %v806, %v808
        %v812 = vadd.f32 %v752, %v807
        %v813 = vadd.f32 %v753, %v809
        %s814 = sld [smem:[#allocation9 + $0x2a]]
        %v815 = vstv %s814
        %v816 = vmul.f32 %v815, %v504
        %v817 = vmul.f32 %v815, %v505
        %v818 = vmul.f32 %v815, %v506
        %v822 = vrot.slane %v816, 2
        %v823 = vrot.slane %v817, 2
        %v824 = vsel %vm804, %v822, %v823
        %v825 = vrot.slane %v818, 2
        %v826 = vsel %vm804, %v823, %v825
        %v829 = vadd.f32 %v773, %v824
        %v830 = vadd.f32 %v774, %v826
        %s831 = sld [smem:[#allocation9 + $0x4e]]
        %v832 = vstv %s831
        %v833 = vmul.f32 %v832, %v504
        %v834 = vmul.f32 %v832, %v505
        %v835 = vmul.f32 %v832, %v506
        %v839 = vrot.slane %v833, 2
        %v840 = vrot.slane %v834, 2
        %v841 = vsel %vm804, %v839, %v840
        %v842 = vrot.slane %v835, 2
        %v843 = vsel %vm804, %v840, %v842
        %v846 = vadd.f32 %v794, %v841
        %v847 = vadd.f32 %v795, %v843
        %s848 = sld [smem:[#allocation9 + $0x7]]
        %v849 = vstv %s848
        %v850 = vmul.f32 %v849, %v504
        %v851 = vmul.f32 %v849, %v505
        %v852 = vmul.f32 %v849, %v506
        %v856 = vrot.slane %v850, 2
        %v857 = vrot.slane %v851, 2
        %v858 = vsel %vm804, %v856, %v857
        %v859 = vrot.slane %v852, 2
        %v860 = vsel %vm804, %v857, %v859
        %861 = vrot.lane.b32.xlu0 %v858, 127
        %v862 = vpop.permute.xlu0 %861
        %863 = vrot.lane.b32.xlu0 %v860, 127
        %v864 = vpop.permute.xlu0 %863
        %v867 = vadd.f32 %v812, %v862
        %v868 = vadd.f32 %v813, %v864
        %s869 = sld [smem:[#allocation9 + $0x2b]]
        %v870 = vstv %s869
        %v871 = vmul.f32 %v870, %v504
        %v872 = vmul.f32 %v870, %v505
        %v873 = vmul.f32 %v870, %v506
        %v877 = vrot.slane %v871, 2
        %v878 = vrot.slane %v872, 2
        %v879 = vsel %vm804, %v877, %v878
        %v880 = vrot.slane %v873, 2
        %v881 = vsel %vm804, %v878, %v880
        %882 = vrot.lane.b32.xlu0 %v879, 127
        %v883 = vpop.permute.xlu0 %882
        %884 = vrot.lane.b32.xlu0 %v881, 127
        %v885 = vpop.permute.xlu0 %884
        %v888 = vadd.f32 %v829, %v883
        %v889 = vadd.f32 %v830, %v885
        %s890 = sld [smem:[#allocation9 + $0x4f]]
        %v891 = vstv %s890
        %v892 = vmul.f32 %v891, %v504
        %v893 = vmul.f32 %v891, %v505
        %v894 = vmul.f32 %v891, %v506
        %v898 = vrot.slane %v892, 2
        %v899 = vrot.slane %v893, 2
        %v900 = vsel %vm804, %v898, %v899
        %v901 = vrot.slane %v894, 2
        %v902 = vsel %vm804, %v899, %v901
        %903 = vrot.lane.b32.xlu0 %v900, 127
        %v904 = vpop.permute.xlu0 %903
        %905 = vrot.lane.b32.xlu0 %v902, 127
        %v906 = vpop.permute.xlu0 %905
        %v909 = vadd.f32 %v846, %v904
        %v910 = vadd.f32 %v847, %v906
        %s911 = sld [smem:[#allocation9 + $0x8]]
        %v912 = vstv %s911
        %v913 = vmul.f32 %v912, %v504
        %v914 = vmul.f32 %v912, %v505
        %v915 = vmul.f32 %v912, %v506
        %v919 = vrot.slane %v913, 2
        %v920 = vrot.slane %v914, 2
        %v921 = vsel %vm804, %v919, %v920
        %v922 = vrot.slane %v915, 2
        %v923 = vsel %vm804, %v920, %v922
        %924 = vrot.lane.b32.xlu0 %v921, 126
        %v925 = vpop.permute.xlu0 %924
        %926 = vrot.lane.b32.xlu0 %v923, 126
        %v927 = vpop.permute.xlu0 %926
        %v930 = vadd.f32 %v867, %v925
        %v931 = vadd.f32 %v868, %v927
        %s932 = sld [smem:[#allocation9 + $0x2c]]
        %v933 = vstv %s932
        %v934 = vmul.f32 %v933, %v504
        %v935 = vmul.f32 %v933, %v505
        %v936 = vmul.f32 %v933, %v506
        %v940 = vrot.slane %v934, 2
        %v941 = vrot.slane %v935, 2
        %v942 = vsel %vm804, %v940, %v941
        %v943 = vrot.slane %v936, 2
        %v944 = vsel %vm804, %v941, %v943
        %945 = vrot.lane.b32.xlu0 %v942, 126
        %v946 = vpop.permute.xlu0 %945
        %947 = vrot.lane.b32.xlu0 %v944, 126
        %v948 = vpop.permute.xlu0 %947
        %v951 = vadd.f32 %v888, %v946
        %v952 = vadd.f32 %v889, %v948
        %s953 = sld [smem:[#allocation9 + $0x50]]
        %v954 = vstv %s953
        %v955 = vmul.f32 %v954, %v504
        %v956 = vmul.f32 %v954, %v505
        %v957 = vmul.f32 %v954, %v506
        %v961 = vrot.slane %v955, 2
        %v962 = vrot.slane %v956, 2
        %v963 = vsel %vm804, %v961, %v962
        %v964 = vrot.slane %v957, 2
        %v965 = vsel %vm804, %v962, %v964
        %966 = vrot.lane.b32.xlu0 %v963, 126
        %v967 = vpop.permute.xlu0 %966
        %968 = vrot.lane.b32.xlu0 %v965, 126
        %v969 = vpop.permute.xlu0 %968
        %v972 = vadd.f32 %v909, %v967
        %v973 = vadd.f32 %v910, %v969
        %s974 = sld [smem:[#allocation9 + $0x9]]
        %v975 = vstv %s974
        %v976 = vmul.f32 %v975, %v507
        %v977 = vmul.f32 %v975, %v508
        %v978 = vadd.f32 %v930, %v976
        %v979 = vadd.f32 %v931, %v977
        %s980 = sld [smem:[#allocation9 + $0x2d]]
        %v981 = vstv %s980
        %v982 = vmul.f32 %v981, %v507
        %v983 = vmul.f32 %v981, %v508
        %v984 = vadd.f32 %v951, %v982
        %v985 = vadd.f32 %v952, %v983
        %s986 = sld [smem:[#allocation9 + $0x51]]
        %v987 = vstv %s986
        %v988 = vmul.f32 %v987, %v507
        %v989 = vmul.f32 %v987, %v508
        %v990 = vadd.f32 %v972, %v988
        %v991 = vadd.f32 %v973, %v989
        %s992 = sld [smem:[#allocation9 + $0xa]]
        %v993 = vstv %s992
        %v994 = vmul.f32 %v993, %v507
        %v995 = vmul.f32 %v993, %v508
        %998 = vrot.lane.b32.xlu0 %v994, 127
        %v999 = vpop.permute.xlu0 %998
        %1000 = vrot.lane.b32.xlu0 %v995, 127
        %v1001 = vpop.permute.xlu0 %1000
        %v1004 = vadd.f32 %v978, %v999
        %v1005 = vadd.f32 %v979, %v1001
        %s1006 = sld [smem:[#allocation9 + $0x2e]]
        %v1007 = vstv %s1006
        %v1008 = vmul.f32 %v1007, %v507
        %v1009 = vmul.f32 %v1007, %v508
        %1012 = vrot.lane.b32.xlu0 %v1008, 127
        %v1013 = vpop.permute.xlu0 %1012
        %1014 = vrot.lane.b32.xlu0 %v1009, 127
        %v1015 = vpop.permute.xlu0 %1014
        %v1018 = vadd.f32 %v984, %v1013
        %v1019 = vadd.f32 %v985, %v1015
        %s1020 = sld [smem:[#allocation9 + $0x52]]
        %v1021 = vstv %s1020
        %v1022 = vmul.f32 %v1021, %v507
        %v1023 = vmul.f32 %v1021, %v508
        %1026 = vrot.lane.b32.xlu0 %v1022, 127
        %v1027 = vpop.permute.xlu0 %1026
        %1028 = vrot.lane.b32.xlu0 %v1023, 127
        %v1029 = vpop.permute.xlu0 %1028
        %v1032 = vadd.f32 %v990, %v1027
        %v1033 = vadd.f32 %v991, %v1029
        %s1034 = sld [smem:[#allocation9 + $0xb]]
        %v1035 = vstv %s1034
        %v1036 = vmul.f32 %v1035, %v507
        %v1037 = vmul.f32 %v1035, %v508
        %1040 = vrot.lane.b32.xlu0 %v1036, 126
        %v1041 = vpop.permute.xlu0 %1040
        %1042 = vrot.lane.b32.xlu0 %v1037, 126
        %v1043 = vpop.permute.xlu0 %1042
        %v1046 = vadd.f32 %v1004, %v1041
        %v1047 = vadd.f32 %v1005, %v1043
        %s1048 = sld [smem:[#allocation9 + $0x2f]]
        %v1049 = vstv %s1048
        %v1050 = vmul.f32 %v1049, %v507
        %v1051 = vmul.f32 %v1049, %v508
        %1054 = vrot.lane.b32.xlu0 %v1050, 126
        %v1055 = vpop.permute.xlu0 %1054
        %1056 = vrot.lane.b32.xlu0 %v1051, 126
        %v1057 = vpop.permute.xlu0 %1056
        %v1060 = vadd.f32 %v1018, %v1055
        %v1061 = vadd.f32 %v1019, %v1057
        %s1062 = sld [smem:[#allocation9 + $0x53]]
        %v1063 = vstv %s1062
        %v1064 = vmul.f32 %v1063, %v507
        %v1065 = vmul.f32 %v1063, %v508
        %1068 = vrot.lane.b32.xlu0 %v1064, 126
        %v1069 = vpop.permute.xlu0 %1068
        %1070 = vrot.lane.b32.xlu0 %v1065, 126
        %v1071 = vpop.permute.xlu0 %1070
        %v1074 = vadd.f32 %v1032, %v1069
        %v1075 = vadd.f32 %v1033, %v1071
        %s1076 = sld [smem:[#allocation9 + $0xc]]
        %v1077 = vstv %s1076
        %v1078 = vmul.f32 %v1077, %v507
        %v1079 = vmul.f32 %v1077, %v508
        %v1080 = vmul.f32 %v1077, %v509
        %v1084 = vrot.slane %v1078, 1
        %v1085 = vrot.slane %v1079, 1
        %v1086 = vsel %vm626, %v1084, %v1085
        %v1087 = vrot.slane %v1080, 1
        %v1088 = vsel %vm626, %v1085, %v1087
        %v1091 = vadd.f32 %v1046, %v1086
        %v1092 = vadd.f32 %v1047, %v1088
        %s1093 = sld [smem:[#allocation9 + $0x30]]
        %v1094 = vstv %s1093
        %v1095 = vmul.f32 %v1094, %v507
        %v1096 = vmul.f32 %v1094, %v508
        %v1097 = vmul.f32 %v1094, %v509
        %v1101 = vrot.slane %v1095, 1
        %v1102 = vrot.slane %v1096, 1
        %v1103 = vsel %vm626, %v1101, %v1102
        %v1104 = vrot.slane %v1097, 1
        %v1105 = vsel %vm626, %v1102, %v1104
        %v1108 = vadd.f32 %v1060, %v1103
        %v1109 = vadd.f32 %v1061, %v1105
        %s1110 = sld [smem:[#allocation9 + $0x54]]
        %v1111 = vstv %s1110
        %v1112 = vmul.f32 %v1111, %v507
        %v1113 = vmul.f32 %v1111, %v508
        %v1114 = vmul.f32 %v1111, %v509
        %v1118 = vrot.slane %v1112, 1
        %v1119 = vrot.slane %v1113, 1
        %v1120 = vsel %vm626, %v1118, %v1119
        %v1121 = vrot.slane %v1114, 1
        %v1122 = vsel %vm626, %v1119, %v1121
        %v1125 = vadd.f32 %v1074, %v1120
        %v1126 = vadd.f32 %v1075, %v1122
        %s1127 = sld [smem:[#allocation9 + $0xd]]
        %v1128 = vstv %s1127
        %v1129 = vmul.f32 %v1128, %v507
        %v1130 = vmul.f32 %v1128, %v508
        %v1131 = vmul.f32 %v1128, %v509
        %v1135 = vrot.slane %v1129, 1
        %v1136 = vrot.slane %v1130, 1
        %v1137 = vsel %vm626, %v1135, %v1136
        %v1138 = vrot.slane %v1131, 1
        %v1139 = vsel %vm626, %v1136, %v1138
        %1140 = vrot.lane.b32.xlu0 %v1137, 127
        %v1141 = vpop.permute.xlu0 %1140
        %1142 = vrot.lane.b32.xlu0 %v1139, 127
        %v1143 = vpop.permute.xlu0 %1142
        %v1146 = vadd.f32 %v1091, %v1141
        %v1147 = vadd.f32 %v1092, %v1143
        %s1148 = sld [smem:[#allocation9 + $0x31]]
        %v1149 = vstv %s1148
        %v1150 = vmul.f32 %v1149, %v507
        %v1151 = vmul.f32 %v1149, %v508
        %v1152 = vmul.f32 %v1149, %v509
        %v1156 = vrot.slane %v1150, 1
        %v1157 = vrot.slane %v1151, 1
        %v1158 = vsel %vm626, %v1156, %v1157
        %v1159 = vrot.slane %v1152, 1
        %v1160 = vsel %vm626, %v1157, %v1159
        %1161 = vrot.lane.b32.xlu0 %v1158, 127
        %v1162 = vpop.permute.xlu0 %1161
        %1163 = vrot.lane.b32.xlu0 %v1160, 127
        %v1164 = vpop.permute.xlu0 %1163
        %v1167 = vadd.f32 %v1108, %v1162
        %v1168 = vadd.f32 %v1109, %v1164
        %s1169 = sld [smem:[#allocation9 + $0x55]]
        %v1170 = vstv %s1169
        %v1171 = vmul.f32 %v1170, %v507
        %v1172 = vmul.f32 %v1170, %v508
        %v1173 = vmul.f32 %v1170, %v509
        %v1177 = vrot.slane %v1171, 1
        %v1178 = vrot.slane %v1172, 1
        %v1179 = vsel %vm626, %v1177, %v1178
        %v1180 = vrot.slane %v1173, 1
        %v1181 = vsel %vm626, %v1178, %v1180
        %1182 = vrot.lane.b32.xlu0 %v1179, 127
        %v1183 = vpop.permute.xlu0 %1182
        %1184 = vrot.lane.b32.xlu0 %v1181, 127
        %v1185 = vpop.permute.xlu0 %1184
        %v1188 = vadd.f32 %v1125, %v1183
        %v1189 = vadd.f32 %v1126, %v1185
        %s1190 = sld [smem:[#allocation9 + $0xe]]
        %v1191 = vstv %s1190
        %v1192 = vmul.f32 %v1191, %v507
        %v1193 = vmul.f32 %v1191, %v508
        %v1194 = vmul.f32 %v1191, %v509
        %v1198 = vrot.slane %v1192, 1
        %v1199 = vrot.slane %v1193, 1
        %v1200 = vsel %vm626, %v1198, %v1199
        %v1201 = vrot.slane %v1194, 1
        %v1202 = vsel %vm626, %v1199, %v1201
        %1203 = vrot.lane.b32.xlu0 %v1200, 126
        %v1204 = vpop.permute.xlu0 %1203
        %1205 = vrot.lane.b32.xlu0 %v1202, 126
        %v1206 = vpop.permute.xlu0 %1205
        %v1209 = vadd.f32 %v1146, %v1204
        %v1210 = vadd.f32 %v1147, %v1206
        %s1211 = sld [smem:[#allocation9 + $0x32]]
        %v1212 = vstv %s1211
        %v1213 = vmul.f32 %v1212, %v507
        %v1214 = vmul.f32 %v1212, %v508
        %v1215 = vmul.f32 %v1212, %v509
        %v1219 = vrot.slane %v1213, 1
        %v1220 = vrot.slane %v1214, 1
        %v1221 = vsel %vm626, %v1219, %v1220
        %v1222 = vrot.slane %v1215, 1
        %v1223 = vsel %vm626, %v1220, %v1222
        %1224 = vrot.lane.b32.xlu0 %v1221, 126
        %v1225 = vpop.permute.xlu0 %1224
        %1226 = vrot.lane.b32.xlu0 %v1223, 126
        %v1227 = vpop.permute.xlu0 %1226
        %v1230 = vadd.f32 %v1167, %v1225
        %v1231 = vadd.f32 %v1168, %v1227
        %s1232 = sld [smem:[#allocation9 + $0x56]]
        %v1233 = vstv %s1232
        %v1234 = vmul.f32 %v1233, %v507
        %v1235 = vmul.f32 %v1233, %v508
        %v1236 = vmul.f32 %v1233, %v509
        %v1240 = vrot.slane %v1234, 1
        %v1241 = vrot.slane %v1235, 1
        %v1242 = vsel %vm626, %v1240, %v1241
        %v1243 = vrot.slane %v1236, 1
        %v1244 = vsel %vm626, %v1241, %v1243
        %1245 = vrot.lane.b32.xlu0 %v1242, 126
        %v1246 = vpop.permute.xlu0 %1245
        %1247 = vrot.lane.b32.xlu0 %v1244, 126
        %v1248 = vpop.permute.xlu0 %1247
        %v1251 = vadd.f32 %v1188, %v1246
        %v1252 = vadd.f32 %v1189, %v1248
        %s1253 = sld [smem:[#allocation9 + $0xf]]
        %v1254 = vstv %s1253
        %v1255 = vmul.f32 %v1254, %v507
        %v1256 = vmul.f32 %v1254, %v508
        %v1257 = vmul.f32 %v1254, %v509
        %v1261 = vrot.slane %v1255, 2
        %v1262 = vrot.slane %v1256, 2
        %v1263 = vsel %vm804, %v1261, %v1262
        %v1264 = vrot.slane %v1257, 2
        %v1265 = vsel %vm804, %v1262, %v1264
        %v1268 = vadd.f32 %v1209, %v1263
        %v1269 = vadd.f32 %v1210, %v1265
        %s1270 = sld [smem:[#allocation9 + $0x33]]
        %v1271 = vstv %s1270
        %v1272 = vmul.f32 %v1271, %v507
        %v1273 = vmul.f32 %v1271, %v508
        %v1274 = vmul.f32 %v1271, %v509
        %v1278 = vrot.slane %v1272, 2
        %v1279 = vrot.slane %v1273, 2
        %v1280 = vsel %vm804, %v1278, %v1279
        %v1281 = vrot.slane %v1274, 2
        %v1282 = vsel %vm804, %v1279, %v1281
        %v1285 = vadd.f32 %v1230, %v1280
        %v1286 = vadd.f32 %v1231, %v1282
        %s1287 = sld [smem:[#allocation9 + $0x57]]
        %v1288 = vstv %s1287
        %v1289 = vmul.f32 %v1288, %v507
        %v1290 = vmul.f32 %v1288, %v508
        %v1291 = vmul.f32 %v1288, %v509
        %v1295 = vrot.slane %v1289, 2
        %v1296 = vrot.slane %v1290, 2
        %v1297 = vsel %vm804, %v1295, %v1296
        %v1298 = vrot.slane %v1291, 2
        %v1299 = vsel %vm804, %v1296, %v1298
        %v1302 = vadd.f32 %v1251, %v1297
        %v1303 = vadd.f32 %v1252, %v1299
        %s1304 = sld [smem:[#allocation9 + $0x10]]
        %v1305 = vstv %s1304
        %v1306 = vmul.f32 %v1305, %v507
        %v1307 = vmul.f32 %v1305, %v508
        %v1308 = vmul.f32 %v1305, %v509
        %v1312 = vrot.slane %v1306, 2
        %v1313 = vrot.slane %v1307, 2
        %v1314 = vsel %vm804, %v1312, %v1313
        %v1315 = vrot.slane %v1308, 2
        %v1316 = vsel %vm804, %v1313, %v1315
        %1317 = vrot.lane.b32.xlu0 %v1314, 127
        %v1318 = vpop.permute.xlu0 %1317
        %1319 = vrot.lane.b32.xlu0 %v1316, 127
        %v1320 = vpop.permute.xlu0 %1319
        %v1323 = vadd.f32 %v1268, %v1318
        %v1324 = vadd.f32 %v1269, %v1320
        %s1325 = sld [smem:[#allocation9 + $0x34]]
        %v1326 = vstv %s1325
        %v1327 = vmul.f32 %v1326, %v507
        %v1328 = vmul.f32 %v1326, %v508
        %v1329 = vmul.f32 %v1326, %v509
        %v1333 = vrot.slane %v1327, 2
        %v1334 = vrot.slane %v1328, 2
        %v1335 = vsel %vm804, %v1333, %v1334
        %v1336 = vrot.slane %v1329, 2
        %v1337 = vsel %vm804, %v1334, %v1336
        %1338 = vrot.lane.b32.xlu0 %v1335, 127
        %v1339 = vpop.permute.xlu0 %1338
        %1340 = vrot.lane.b32.xlu0 %v1337, 127
        %v1341 = vpop.permute.xlu0 %1340
        %v1344 = vadd.f32 %v1285, %v1339
        %v1345 = vadd.f32 %v1286, %v1341
        %s1346 = sld [smem:[#allocation9 + $0x58]]
        %v1347 = vstv %s1346
        %v1348 = vmul.f32 %v1347, %v507
        %v1349 = vmul.f32 %v1347, %v508
        %v1350 = vmul.f32 %v1347, %v509
        %v1354 = vrot.slane %v1348, 2
        %v1355 = vrot.slane %v1349, 2
        %v1356 = vsel %vm804, %v1354, %v1355
        %v1357 = vrot.slane %v1350, 2
        %v1358 = vsel %vm804, %v1355, %v1357
        %1359 = vrot.lane.b32.xlu0 %v1356, 127
        %v1360 = vpop.permute.xlu0 %1359
        %1361 = vrot.lane.b32.xlu0 %v1358, 127
        %v1362 = vpop.permute.xlu0 %1361
        %v1365 = vadd.f32 %v1302, %v1360
        %v1366 = vadd.f32 %v1303, %v1362
        %s1367 = sld [smem:[#allocation9 + $0x11]]
        %v1368 = vstv %s1367
        %v1369 = vmul.f32 %v1368, %v507
        %v1370 = vmul.f32 %v1368, %v508
        %v1371 = vmul.f32 %v1368, %v509
        %v1375 = vrot.slane %v1369, 2
        %v1376 = vrot.slane %v1370, 2
        %v1377 = vsel %vm804, %v1375, %v1376
        %v1378 = vrot.slane %v1371, 2
        %v1379 = vsel %vm804, %v1376, %v1378
        %1380 = vrot.lane.b32.xlu0 %v1377, 126
        %v1381 = vpop.permute.xlu0 %1380
        %1382 = vrot.lane.b32.xlu0 %v1379, 126
        %v1383 = vpop.permute.xlu0 %1382
        %v1386 = vadd.f32 %v1323, %v1381
        %v1387 = vadd.f32 %v1324, %v1383
        %s1388 = sld [smem:[#allocation9 + $0x35]]
        %v1389 = vstv %s1388
        %v1390 = vmul.f32 %v1389, %v507
        %v1391 = vmul.f32 %v1389, %v508
        %v1392 = vmul.f32 %v1389, %v509
        %v1396 = vrot.slane %v1390, 2
        %v1397 = vrot.slane %v1391, 2
        %v1398 = vsel %vm804, %v1396, %v1397
        %v1399 = vrot.slane %v1392, 2
        %v1400 = vsel %vm804, %v1397, %v1399
        %1401 = vrot.lane.b32.xlu0 %v1398, 126
        %v1402 = vpop.permute.xlu0 %1401
        %1403 = vrot.lane.b32.xlu0 %v1400, 126
        %v1404 = vpop.permute.xlu0 %1403
        %v1407 = vadd.f32 %v1344, %v1402
        %v1408 = vadd.f32 %v1345, %v1404
        %s1409 = sld [smem:[#allocation9 + $0x59]]
        %v1410 = vstv %s1409
        %v1411 = vmul.f32 %v1410, %v507
        %v1412 = vmul.f32 %v1410, %v508
        %v1413 = vmul.f32 %v1410, %v509
        %v1417 = vrot.slane %v1411, 2
        %v1418 = vrot.slane %v1412, 2
        %v1419 = vsel %vm804, %v1417, %v1418
        %v1420 = vrot.slane %v1413, 2
        %v1421 = vsel %vm804, %v1418, %v1420
        %1422 = vrot.lane.b32.xlu0 %v1419, 126
        %v1423 = vpop.permute.xlu0 %1422
        %1424 = vrot.lane.b32.xlu0 %v1421, 126
        %v1425 = vpop.permute.xlu0 %1424
        %v1428 = vadd.f32 %v1365, %v1423
        %v1429 = vadd.f32 %v1366, %v1425
        %s1430 = sld [smem:[#allocation9 + $0x12]]
        %v1431 = vstv %s1430
        %v1432 = vmul.f32 %v1431, %v510
        %v1433 = vmul.f32 %v1431, %v511
        %v1434 = vadd.f32 %v1386, %v1432
        %v1435 = vadd.f32 %v1387, %v1433
        %s1436 = sld [smem:[#allocation9 + $0x36]]
        %v1437 = vstv %s1436
        %v1438 = vmul.f32 %v1437, %v510
        %v1439 = vmul.f32 %v1437, %v511
        %v1440 = vadd.f32 %v1407, %v1438
        %v1441 = vadd.f32 %v1408, %v1439
        %s1442 = sld [smem:[#allocation9 + $0x5a]]
        %v1443 = vstv %s1442
        %v1444 = vmul.f32 %v1443, %v510
        %v1445 = vmul.f32 %v1443, %v511
        %v1446 = vadd.f32 %v1428, %v1444
        %v1447 = vadd.f32 %v1429, %v1445
        %s1448 = sld [smem:[#allocation9 + $0x13]]
        %v1449 = vstv %s1448
        %v1450 = vmul.f32 %v1449, %v510
        %v1451 = vmul.f32 %v1449, %v511
        %1454 = vrot.lane.b32.xlu0 %v1450, 127
        %v1455 = vpop.permute.xlu0 %1454
        %1456 = vrot.lane.b32.xlu0 %v1451, 127
        %v1457 = vpop.permute.xlu0 %1456
        %v1460 = vadd.f32 %v1434, %v1455
        %v1461 = vadd.f32 %v1435, %v1457
        %s1462 = sld [smem:[#allocation9 + $0x37]]
        %v1463 = vstv %s1462
        %v1464 = vmul.f32 %v1463, %v510
        %v1465 = vmul.f32 %v1463, %v511
        %1468 = vrot.lane.b32.xlu0 %v1464, 127
        %v1469 = vpop.permute.xlu0 %1468
        %1470 = vrot.lane.b32.xlu0 %v1465, 127
        %v1471 = vpop.permute.xlu0 %1470
        %v1474 = vadd.f32 %v1440, %v1469
        %v1475 = vadd.f32 %v1441, %v1471
        %s1476 = sld [smem:[#allocation9 + $0x5b]]
        %v1477 = vstv %s1476
        %v1478 = vmul.f32 %v1477, %v510
        %v1479 = vmul.f32 %v1477, %v511
        %1482 = vrot.lane.b32.xlu0 %v1478, 127
        %v1483 = vpop.permute.xlu0 %1482
        %1484 = vrot.lane.b32.xlu0 %v1479, 127
        %v1485 = vpop.permute.xlu0 %1484
        %v1488 = vadd.f32 %v1446, %v1483
        %v1489 = vadd.f32 %v1447, %v1485
        %s1490 = sld [smem:[#allocation9 + $0x14]]
        %v1491 = vstv %s1490
        %v1492 = vmul.f32 %v1491, %v510
        %v1493 = vmul.f32 %v1491, %v511
        %1496 = vrot.lane.b32.xlu0 %v1492, 126
        %v1497 = vpop.permute.xlu0 %1496
        %1498 = vrot.lane.b32.xlu0 %v1493, 126
        %v1499 = vpop.permute.xlu0 %1498
        %v1502 = vadd.f32 %v1460, %v1497
        %v1503 = vadd.f32 %v1461, %v1499
        %s1504 = sld [smem:[#allocation9 + $0x38]]
        %v1505 = vstv %s1504
        %v1506 = vmul.f32 %v1505, %v510
        %v1507 = vmul.f32 %v1505, %v511
        %1510 = vrot.lane.b32.xlu0 %v1506, 126
        %v1511 = vpop.permute.xlu0 %1510
        %1512 = vrot.lane.b32.xlu0 %v1507, 126
        %v1513 = vpop.permute.xlu0 %1512
        %v1516 = vadd.f32 %v1474, %v1511
        %v1517 = vadd.f32 %v1475, %v1513
        %s1518 = sld [smem:[#allocation9 + $0x5c]]
        %v1519 = vstv %s1518
        %v1520 = vmul.f32 %v1519, %v510
        %v1521 = vmul.f32 %v1519, %v511
        %1524 = vrot.lane.b32.xlu0 %v1520, 126
        %v1525 = vpop.permute.xlu0 %1524
        %1526 = vrot.lane.b32.xlu0 %v1521, 126
        %v1527 = vpop.permute.xlu0 %1526
        %v1530 = vadd.f32 %v1488, %v1525
        %v1531 = vadd.f32 %v1489, %v1527
        %s1532 = sld [smem:[#allocation9 + $0x15]]
        %v1533 = vstv %s1532
        %v1534 = vmul.f32 %v1533, %v510
        %v1535 = vmul.f32 %v1533, %v511
        %v1536 = vmul.f32 %v1533, %v512
        %v1540 = vrot.slane %v1534, 1
        %v1541 = vrot.slane %v1535, 1
        %v1542 = vsel %vm626, %v1540, %v1541
        %v1543 = vrot.slane %v1536, 1
        %v1544 = vsel %vm626, %v1541, %v1543
        %v1547 = vadd.f32 %v1502, %v1542
        %v1548 = vadd.f32 %v1503, %v1544
        %s1549 = sld [smem:[#allocation9 + $0x39]]
        %v1550 = vstv %s1549
        %v1551 = vmul.f32 %v1550, %v510
        %v1552 = vmul.f32 %v1550, %v511
        %v1553 = vmul.f32 %v1550, %v512
        %v1557 = vrot.slane %v1551, 1
        %v1558 = vrot.slane %v1552, 1
        %v1559 = vsel %vm626, %v1557, %v1558
        %v1560 = vrot.slane %v1553, 1
        %v1561 = vsel %vm626, %v1558, %v1560
        %v1564 = vadd.f32 %v1516, %v1559
        %v1565 = vadd.f32 %v1517, %v1561
        %s1566 = sld [smem:[#allocation9 + $0x5d]]
        %v1567 = vstv %s1566
        %v1568 = vmul.f32 %v1567, %v510
        %v1569 = vmul.f32 %v1567, %v511
        %v1570 = vmul.f32 %v1567, %v512
        %v1574 = vrot.slane %v1568, 1
        %v1575 = vrot.slane %v1569, 1
        %v1576 = vsel %vm626, %v1574, %v1575
        %v1577 = vrot.slane %v1570, 1
        %v1578 = vsel %vm626, %v1575, %v1577
        %v1581 = vadd.f32 %v1530, %v1576
        %v1582 = vadd.f32 %v1531, %v1578
        %s1583 = sld [smem:[#allocation9 + $0x16]]
        %v1584 = vstv %s1583
        %v1585 = vmul.f32 %v1584, %v510
        %v1586 = vmul.f32 %v1584, %v511
        %v1587 = vmul.f32 %v1584, %v512
        %v1591 = vrot.slane %v1585, 1
        %v1592 = vrot.slane %v1586, 1
        %v1593 = vsel %vm626, %v1591, %v1592
        %v1594 = vrot.slane %v1587, 1
        %v1595 = vsel %vm626, %v1592, %v1594
        %1596 = vrot.lane.b32.xlu0 %v1593, 127
        %v1597 = vpop.permute.xlu0 %1596
        %1598 = vrot.lane.b32.xlu0 %v1595, 127
        %v1599 = vpop.permute.xlu0 %1598
        %v1602 = vadd.f32 %v1547, %v1597
        %v1603 = vadd.f32 %v1548, %v1599
        %s1604 = sld [smem:[#allocation9 + $0x3a]]
        %v1605 = vstv %s1604
        %v1606 = vmul.f32 %v1605, %v510
        %v1607 = vmul.f32 %v1605, %v511
        %v1608 = vmul.f32 %v1605, %v512
        %v1612 = vrot.slane %v1606, 1
        %v1613 = vrot.slane %v1607, 1
        %v1614 = vsel %vm626, %v1612, %v1613
        %v1615 = vrot.slane %v1608, 1
        %v1616 = vsel %vm626, %v1613, %v1615
        %1617 = vrot.lane.b32.xlu0 %v1614, 127
        %v1618 = vpop.permute.xlu0 %1617
        %1619 = vrot.lane.b32.xlu0 %v1616, 127
        %v1620 = vpop.permute.xlu0 %1619
        %v1623 = vadd.f32 %v1564, %v1618
        %v1624 = vadd.f32 %v1565, %v1620
        %s1625 = sld [smem:[#allocation9 + $0x5e]]
        %v1626 = vstv %s1625
        %v1627 = vmul.f32 %v1626, %v510
        %v1628 = vmul.f32 %v1626, %v511
        %v1629 = vmul.f32 %v1626, %v512
        %v1633 = vrot.slane %v1627, 1
        %v1634 = vrot.slane %v1628, 1
        %v1635 = vsel %vm626, %v1633, %v1634
        %v1636 = vrot.slane %v1629, 1
        %v1637 = vsel %vm626, %v1634, %v1636
        %1638 = vrot.lane.b32.xlu0 %v1635, 127
        %v1639 = vpop.permute.xlu0 %1638
        %1640 = vrot.lane.b32.xlu0 %v1637, 127
        %v1641 = vpop.permute.xlu0 %1640
        %v1644 = vadd.f32 %v1581, %v1639
        %v1645 = vadd.f32 %v1582, %v1641
        %s1646 = sld [smem:[#allocation9 + $0x17]]
        %v1647 = vstv %s1646
        %v1648 = vmul.f32 %v1647, %v510
        %v1649 = vmul.f32 %v1647, %v511
        %v1650 = vmul.f32 %v1647, %v512
        %v1654 = vrot.slane %v1648, 1
        %v1655 = vrot.slane %v1649, 1
        %v1656 = vsel %vm626, %v1654, %v1655
        %v1657 = vrot.slane %v1650, 1
        %v1658 = vsel %vm626, %v1655, %v1657
        %1659 = vrot.lane.b32.xlu0 %v1656, 126
        %v1660 = vpop.permute.xlu0 %1659
        %1661 = vrot.lane.b32.xlu0 %v1658, 126
        %v1662 = vpop.permute.xlu0 %1661
        %v1665 = vadd.f32 %v1602, %v1660
        %v1666 = vadd.f32 %v1603, %v1662
        %s1667 = sld [smem:[#allocation9 + $0x3b]]
        %v1668 = vstv %s1667
        %v1669 = vmul.f32 %v1668, %v510
        %v1670 = vmul.f32 %v1668, %v511
        %v1671 = vmul.f32 %v1668, %v512
        %v1675 = vrot.slane %v1669, 1
        %v1676 = vrot.slane %v1670, 1
        %v1677 = vsel %vm626, %v1675, %v1676
        %v1678 = vrot.slane %v1671, 1
        %v1679 = vsel %vm626, %v1676, %v1678
        %1680 = vrot.lane.b32.xlu0 %v1677, 126
        %v1681 = vpop.permute.xlu0 %1680
        %1682 = vrot.lane.b32.xlu0 %v1679, 126
        %v1683 = vpop.permute.xlu0 %1682
        %v1686 = vadd.f32 %v1623, %v1681
        %v1687 = vadd.f32 %v1624, %v1683
        %s1688 = sld [smem:[#allocation9 + $0x5f]]
        %v1689 = vstv %s1688
        %v1690 = vmul.f32 %v1689, %v510
        %v1691 = vmul.f32 %v1689, %v511
        %v1692 = vmul.f32 %v1689, %v512
        %v1696 = vrot.slane %v1690, 1
        %v1697 = vrot.slane %v1691, 1
        %v1698 = vsel %vm626, %v1696, %v1697
        %v1699 = vrot.slane %v1692, 1
        %v1700 = vsel %vm626, %v1697, %v1699
        %1701 = vrot.lane.b32.xlu0 %v1698, 126
        %v1702 = vpop.permute.xlu0 %1701
        %1703 = vrot.lane.b32.xlu0 %v1700, 126
        %v1704 = vpop.permute.xlu0 %1703
        %v1707 = vadd.f32 %v1644, %v1702
        %v1708 = vadd.f32 %v1645, %v1704
        %s1709 = sld [smem:[#allocation9 + $0x18]]
        %v1710 = vstv %s1709
        %v1711 = vmul.f32 %v1710, %v510
        %v1712 = vmul.f32 %v1710, %v511
        %v1713 = vmul.f32 %v1710, %v512
        %v1717 = vrot.slane %v1711, 2
        %v1718 = vrot.slane %v1712, 2
        %v1719 = vsel %vm804, %v1717, %v1718
        %v1720 = vrot.slane %v1713, 2
        %v1721 = vsel %vm804, %v1718, %v1720
        %v1724 = vadd.f32 %v1665, %v1719
        %v1725 = vadd.f32 %v1666, %v1721
        %s1726 = sld [smem:[#allocation9 + $0x3c]]
        %v1727 = vstv %s1726
        %v1728 = vmul.f32 %v1727, %v510
        %v1729 = vmul.f32 %v1727, %v511
        %v1730 = vmul.f32 %v1727, %v512
        %v1734 = vrot.slane %v1728, 2
        %v1735 = vrot.slane %v1729, 2
        %v1736 = vsel %vm804, %v1734, %v1735
        %v1737 = vrot.slane %v1730, 2
        %v1738 = vsel %vm804, %v1735, %v1737
        %v1741 = vadd.f32 %v1686, %v1736
        %v1742 = vadd.f32 %v1687, %v1738
        %s1743 = sld [smem:[#allocation9 + $0x60]]
        %v1744 = vstv %s1743
        %v1745 = vmul.f32 %v1744, %v510
        %v1746 = vmul.f32 %v1744, %v511
        %v1747 = vmul.f32 %v1744, %v512
        %v1751 = vrot.slane %v1745, 2
        %v1752 = vrot.slane %v1746, 2
        %v1753 = vsel %vm804, %v1751, %v1752
        %v1754 = vrot.slane %v1747, 2
        %v1755 = vsel %vm804, %v1752, %v1754
        %v1758 = vadd.f32 %v1707, %v1753
        %v1759 = vadd.f32 %v1708, %v1755
        %s1760 = sld [smem:[#allocation9 + $0x19]]
        %v1761 = vstv %s1760
        %v1762 = vmul.f32 %v1761, %v510
        %v1763 = vmul.f32 %v1761, %v511
        %v1764 = vmul.f32 %v1761, %v512
        %v1768 = vrot.slane %v1762, 2
        %v1769 = vrot.slane %v1763, 2
        %v1770 = vsel %vm804, %v1768, %v1769
        %v1771 = vrot.slane %v1764, 2
        %v1772 = vsel %vm804, %v1769, %v1771
        %1773 = vrot.lane.b32.xlu0 %v1770, 127
        %v1774 = vpop.permute.xlu0 %1773
        %1775 = vrot.lane.b32.xlu0 %v1772, 127
        %v1776 = vpop.permute.xlu0 %1775
        %v1779 = vadd.f32 %v1724, %v1774
        %v1780 = vadd.f32 %v1725, %v1776
        %s1781 = sld [smem:[#allocation9 + $0x3d]]
        %v1782 = vstv %s1781
        %v1783 = vmul.f32 %v1782, %v510
        %v1784 = vmul.f32 %v1782, %v511
        %v1785 = vmul.f32 %v1782, %v512
        %v1789 = vrot.slane %v1783, 2
        %v1790 = vrot.slane %v1784, 2
        %v1791 = vsel %vm804, %v1789, %v1790
        %v1792 = vrot.slane %v1785, 2
        %v1793 = vsel %vm804, %v1790, %v1792
        %1794 = vrot.lane.b32.xlu0 %v1791, 127
        %v1795 = vpop.permute.xlu0 %1794
        %1796 = vrot.lane.b32.xlu0 %v1793, 127
        %v1797 = vpop.permute.xlu0 %1796
        %v1800 = vadd.f32 %v1741, %v1795
        %v1801 = vadd.f32 %v1742, %v1797
        %s1802 = sld [smem:[#allocation9 + $0x61]]
        %v1803 = vstv %s1802
        %v1804 = vmul.f32 %v1803, %v510
        %v1805 = vmul.f32 %v1803, %v511
        %v1806 = vmul.f32 %v1803, %v512
        %v1810 = vrot.slane %v1804, 2
        %v1811 = vrot.slane %v1805, 2
        %v1812 = vsel %vm804, %v1810, %v1811
        %v1813 = vrot.slane %v1806, 2
        %v1814 = vsel %vm804, %v1811, %v1813
        %1815 = vrot.lane.b32.xlu0 %v1812, 127
        %v1816 = vpop.permute.xlu0 %1815
        %1817 = vrot.lane.b32.xlu0 %v1814, 127
        %v1818 = vpop.permute.xlu0 %1817
        %v1821 = vadd.f32 %v1758, %v1816
        %v1822 = vadd.f32 %v1759, %v1818
        %s1823 = sld [smem:[#allocation9 + $0x1a]]
        %v1824 = vstv %s1823
        %v1825 = vmul.f32 %v1824, %v510
        %v1826 = vmul.f32 %v1824, %v511
        %v1827 = vmul.f32 %v1824, %v512
        %v1831 = vrot.slane %v1825, 2
        %v1832 = vrot.slane %v1826, 2
        %v1833 = vsel %vm804, %v1831, %v1832
        %v1834 = vrot.slane %v1827, 2
        %v1835 = vsel %vm804, %v1832, %v1834
        %1836 = vrot.lane.b32.xlu0 %v1833, 126
        %v1837 = vpop.permute.xlu0 %1836
        %1838 = vrot.lane.b32.xlu0 %v1835, 126
        %v1839 = vpop.permute.xlu0 %1838
        %v1842 = vadd.f32 %v1779, %v1837
        %v1843 = vadd.f32 %v1780, %v1839
        %s1844 = sld [smem:[#allocation9 + $0x3e]]
        %v1845 = vstv %s1844
        %v1846 = vmul.f32 %v1845, %v510
        %v1847 = vmul.f32 %v1845, %v511
        %v1848 = vmul.f32 %v1845, %v512
        %v1852 = vrot.slane %v1846, 2
        %v1853 = vrot.slane %v1847, 2
        %v1854 = vsel %vm804, %v1852, %v1853
        %v1855 = vrot.slane %v1848, 2
        %v1856 = vsel %vm804, %v1853, %v1855
        %1857 = vrot.lane.b32.xlu0 %v1854, 126
        %v1858 = vpop.permute.xlu0 %1857
        %1859 = vrot.lane.b32.xlu0 %v1856, 126
        %v1860 = vpop.permute.xlu0 %1859
        %v1863 = vadd.f32 %v1800, %v1858
        %v1864 = vadd.f32 %v1801, %v1860
        %s1865 = sld [smem:[#allocation9 + $0x62]]
        %v1866 = vstv %s1865
        %v1867 = vmul.f32 %v1866, %v510
        %v1868 = vmul.f32 %v1866, %v511
        %v1869 = vmul.f32 %v1866, %v512
        %v1873 = vrot.slane %v1867, 2
        %v1874 = vrot.slane %v1868, 2
        %v1875 = vsel %vm804, %v1873, %v1874
        %v1876 = vrot.slane %v1869, 2
        %v1877 = vsel %vm804, %v1874, %v1876
        %1878 = vrot.lane.b32.xlu0 %v1875, 126
        %v1879 = vpop.permute.xlu0 %1878
        %1880 = vrot.lane.b32.xlu0 %v1877, 126
        %v1881 = vpop.permute.xlu0 %1880
        %v1884 = vadd.f32 %v1821, %v1879
        %v1885 = vadd.f32 %v1822, %v1881
        %s1886 = sld [smem:[#allocation9 + $0x1b]]
        %v1887 = vstv %s1886
        %v1888 = vmul.f32 %v1887, %v513
        %v1889 = vmul.f32 %v1887, %v514
        %v1890 = vadd.f32 %v1842, %v1888
        %v1891 = vadd.f32 %v1843, %v1889
        %s1892 = sld [smem:[#allocation9 + $0x3f]]
        %v1893 = vstv %s1892
        %v1894 = vmul.f32 %v1893, %v513
        %v1895 = vmul.f32 %v1893, %v514
        %v1896 = vadd.f32 %v1863, %v1894
        %v1897 = vadd.f32 %v1864, %v1895
        %s1898 = sld [smem:[#allocation9 + $0x63]]
        %v1899 = vstv %s1898
        %v1900 = vmul.f32 %v1899, %v513
        %v1901 = vmul.f32 %v1899, %v514
        %v1902 = vadd.f32 %v1884, %v1900
        %v1903 = vadd.f32 %v1885, %v1901
        %s1904 = sld [smem:[#allocation9 + $0x1c]]
        %v1905 = vstv %s1904
        %v1906 = vmul.f32 %v1905, %v513
        %v1907 = vmul.f32 %v1905, %v514
        %1910 = vrot.lane.b32.xlu0 %v1906, 127
        %v1911 = vpop.permute.xlu0 %1910
        %1912 = vrot.lane.b32.xlu0 %v1907, 127
        %v1913 = vpop.permute.xlu0 %1912
        %v1916 = vadd.f32 %v1890, %v1911
        %v1917 = vadd.f32 %v1891, %v1913
        %s1918 = sld [smem:[#allocation9 + $0x40]]
        %v1919 = vstv %s1918
        %v1920 = vmul.f32 %v1919, %v513
        %v1921 = vmul.f32 %v1919, %v514
        %1924 = vrot.lane.b32.xlu0 %v1920, 127
        %v1925 = vpop.permute.xlu0 %1924
        %1926 = vrot.lane.b32.xlu0 %v1921, 127
        %v1927 = vpop.permute.xlu0 %1926
        %v1930 = vadd.f32 %v1896, %v1925
        %v1931 = vadd.f32 %v1897, %v1927
        %s1932 = sld [smem:[#allocation9 + $0x64]]
        %v1933 = vstv %s1932
        %v1934 = vmul.f32 %v1933, %v513
        %v1935 = vmul.f32 %v1933, %v514
        %1938 = vrot.lane.b32.xlu0 %v1934, 127
        %v1939 = vpop.permute.xlu0 %1938
        %1940 = vrot.lane.b32.xlu0 %v1935, 127
        %v1941 = vpop.permute.xlu0 %1940
        %v1944 = vadd.f32 %v1902, %v1939
        %v1945 = vadd.f32 %v1903, %v1941
        %s1946 = sld [smem:[#allocation9 + $0x1d]]
        %v1947 = vstv %s1946
        %v1948 = vmul.f32 %v1947, %v513
        %v1949 = vmul.f32 %v1947, %v514
        %1952 = vrot.lane.b32.xlu0 %v1948, 126
        %v1953 = vpop.permute.xlu0 %1952
        %1954 = vrot.lane.b32.xlu0 %v1949, 126
        %v1955 = vpop.permute.xlu0 %1954
        %v1958 = vadd.f32 %v1916, %v1953
        %v1959 = vadd.f32 %v1917, %v1955
        %s1960 = sld [smem:[#allocation9 + $0x41]]
        %v1961 = vstv %s1960
        %v1962 = vmul.f32 %v1961, %v513
        %v1963 = vmul.f32 %v1961, %v514
        %1966 = vrot.lane.b32.xlu0 %v1962, 126
        %v1967 = vpop.permute.xlu0 %1966
        %1968 = vrot.lane.b32.xlu0 %v1963, 126
        %v1969 = vpop.permute.xlu0 %1968
        %v1972 = vadd.f32 %v1930, %v1967
        %v1973 = vadd.f32 %v1931, %v1969
        %s1974 = sld [smem:[#allocation9 + $0x65]]
        %v1975 = vstv %s1974
        %v1976 = vmul.f32 %v1975, %v513
        %v1977 = vmul.f32 %v1975, %v514
        %1980 = vrot.lane.b32.xlu0 %v1976, 126
        %v1981 = vpop.permute.xlu0 %1980
        %1982 = vrot.lane.b32.xlu0 %v1977, 126
        %v1983 = vpop.permute.xlu0 %1982
        %v1986 = vadd.f32 %v1944, %v1981
        %v1987 = vadd.f32 %v1945, %v1983
        %s1988 = sld [smem:[#allocation9 + $0x1e]]
        %v1989 = vstv %s1988
        %v1990 = vmul.f32 %v1989, %v513
        %v1991 = vmul.f32 %v1989, %v514
        %v1992 = vmul.f32 %v1989, %v515
        %v1996 = vrot.slane %v1990, 1
        %v1997 = vrot.slane %v1991, 1
        %v1998 = vsel %vm626, %v1996, %v1997
        %v1999 = vrot.slane %v1992, 1
        %v2000 = vsel %vm626, %v1997, %v1999
        %v2003 = vadd.f32 %v1958, %v1998
        %v2004 = vadd.f32 %v1959, %v2000
        %s2005 = sld [smem:[#allocation9 + $0x42]]
        %v2006 = vstv %s2005
        %v2007 = vmul.f32 %v2006, %v513
        %v2008 = vmul.f32 %v2006, %v514
        %v2009 = vmul.f32 %v2006, %v515
        %v2013 = vrot.slane %v2007, 1
        %v2014 = vrot.slane %v2008, 1
        %v2015 = vsel %vm626, %v2013, %v2014
        %v2016 = vrot.slane %v2009, 1
        %v2017 = vsel %vm626, %v2014, %v2016
        %v2020 = vadd.f32 %v1972, %v2015
        %v2021 = vadd.f32 %v1973, %v2017
        %s2022 = sld [smem:[#allocation9 + $0x66]]
        %v2023 = vstv %s2022
        %v2024 = vmul.f32 %v2023, %v513
        %v2025 = vmul.f32 %v2023, %v514
        %v2026 = vmul.f32 %v2023, %v515
        %v2030 = vrot.slane %v2024, 1
        %v2031 = vrot.slane %v2025, 1
        %v2032 = vsel %vm626, %v2030, %v2031
        %v2033 = vrot.slane %v2026, 1
        %v2034 = vsel %vm626, %v2031, %v2033
        %v2037 = vadd.f32 %v1986, %v2032
        %v2038 = vadd.f32 %v1987, %v2034
        %s2039 = sld [smem:[#allocation9 + $0x1f]]
        %v2040 = vstv %s2039
        %v2041 = vmul.f32 %v2040, %v513
        %v2042 = vmul.f32 %v2040, %v514
        %v2043 = vmul.f32 %v2040, %v515
        %v2047 = vrot.slane %v2041, 1
        %v2048 = vrot.slane %v2042, 1
        %v2049 = vsel %vm626, %v2047, %v2048
        %v2050 = vrot.slane %v2043, 1
        %v2051 = vsel %vm626, %v2048, %v2050
        %2052 = vrot.lane.b32.xlu0 %v2049, 127
        %v2053 = vpop.permute.xlu0 %2052
        %2054 = vrot.lane.b32.xlu0 %v2051, 127
        %v2055 = vpop.permute.xlu0 %2054
        %v2058 = vadd.f32 %v2003, %v2053
        %v2059 = vadd.f32 %v2004, %v2055
        %s2060 = sld [smem:[#allocation9 + $0x43]]
        %v2061 = vstv %s2060
        %v2062 = vmul.f32 %v2061, %v513
        %v2063 = vmul.f32 %v2061, %v514
        %v2064 = vmul.f32 %v2061, %v515
        %v2068 = vrot.slane %v2062, 1
        %v2069 = vrot.slane %v2063, 1
        %v2070 = vsel %vm626, %v2068, %v2069
        %v2071 = vrot.slane %v2064, 1
        %v2072 = vsel %vm626, %v2069, %v2071
        %2073 = vrot.lane.b32.xlu0 %v2070, 127
        %v2074 = vpop.permute.xlu0 %2073
        %2075 = vrot.lane.b32.xlu0 %v2072, 127
        %v2076 = vpop.permute.xlu0 %2075
        %v2079 = vadd.f32 %v2020, %v2074
        %v2080 = vadd.f32 %v2021, %v2076
        %s2081 = sld [smem:[#allocation9 + $0x67]]
        %v2082 = vstv %s2081
        %v2083 = vmul.f32 %v2082, %v513
        %v2084 = vmul.f32 %v2082, %v514
        %v2085 = vmul.f32 %v2082, %v515
        %v2089 = vrot.slane %v2083, 1
        %v2090 = vrot.slane %v2084, 1
        %v2091 = vsel %vm626, %v2089, %v2090
        %v2092 = vrot.slane %v2085, 1
        %v2093 = vsel %vm626, %v2090, %v2092
        %2094 = vrot.lane.b32.xlu0 %v2091, 127
        %v2095 = vpop.permute.xlu0 %2094
        %2096 = vrot.lane.b32.xlu0 %v2093, 127
        %v2097 = vpop.permute.xlu0 %2096
        %v2100 = vadd.f32 %v2037, %v2095
        %v2101 = vadd.f32 %v2038, %v2097
        %s2102 = sld [smem:[#allocation9 + $0x20]]
        %v2103 = vstv %s2102
        %v2104 = vmul.f32 %v2103, %v513
        %v2105 = vmul.f32 %v2103, %v514
        %v2106 = vmul.f32 %v2103, %v515
        %v2110 = vrot.slane %v2104, 1
        %v2111 = vrot.slane %v2105, 1
        %v2112 = vsel %vm626, %v2110, %v2111
        %v2113 = vrot.slane %v2106, 1
        %v2114 = vsel %vm626, %v2111, %v2113
        %2115 = vrot.lane.b32.xlu0 %v2112, 126
        %v2116 = vpop.permute.xlu0 %2115
        %2117 = vrot.lane.b32.xlu0 %v2114, 126
        %v2118 = vpop.permute.xlu0 %2117
        %v2121 = vadd.f32 %v2058, %v2116
        %v2122 = vadd.f32 %v2059, %v2118
        %s2123 = sld [smem:[#allocation9 + $0x44]]
        %v2124 = vstv %s2123
        %v2125 = vmul.f32 %v2124, %v513
        %v2126 = vmul.f32 %v2124, %v514
        %v2127 = vmul.f32 %v2124, %v515
        %v2131 = vrot.slane %v2125, 1
        %v2132 = vrot.slane %v2126, 1
        %v2133 = vsel %vm626, %v2131, %v2132
        %v2134 = vrot.slane %v2127, 1
        %v2135 = vsel %vm626, %v2132, %v2134
        %2136 = vrot.lane.b32.xlu0 %v2133, 126
        %v2137 = vpop.permute.xlu0 %2136
        %2138 = vrot.lane.b32.xlu0 %v2135, 126
        %v2139 = vpop.permute.xlu0 %2138
        %v2142 = vadd.f32 %v2079, %v2137
        %v2143 = vadd.f32 %v2080, %v2139
        %s2144 = sld [smem:[#allocation9 + $0x68]]
        %v2145 = vstv %s2144
        %v2146 = vmul.f32 %v2145, %v513
        %v2147 = vmul.f32 %v2145, %v514
        %v2148 = vmul.f32 %v2145, %v515
        %v2152 = vrot.slane %v2146, 1
        %v2153 = vrot.slane %v2147, 1
        %v2154 = vsel %vm626, %v2152, %v2153
        %v2155 = vrot.slane %v2148, 1
        %v2156 = vsel %vm626, %v2153, %v2155
        %2157 = vrot.lane.b32.xlu0 %v2154, 126
        %v2158 = vpop.permute.xlu0 %2157
        %2159 = vrot.lane.b32.xlu0 %v2156, 126
        %v2160 = vpop.permute.xlu0 %2159
        %v2163 = vadd.f32 %v2100, %v2158
        %v2164 = vadd.f32 %v2101, %v2160
        %s2165 = sld [smem:[#allocation9 + $0x21]]
        %v2166 = vstv %s2165
        %v2167 = vmul.f32 %v2166, %v513
        %v2168 = vmul.f32 %v2166, %v514
        %v2169 = vmul.f32 %v2166, %v515
        %v2173 = vrot.slane %v2167, 2
        %v2174 = vrot.slane %v2168, 2
        %v2175 = vsel %vm804, %v2173, %v2174
        %v2176 = vrot.slane %v2169, 2
        %v2177 = vsel %vm804, %v2174, %v2176
        %v2180 = vadd.f32 %v2121, %v2175
        %v2181 = vadd.f32 %v2122, %v2177
        %s2182 = sld [smem:[#allocation9 + $0x45]]
        %v2183 = vstv %s2182
        %v2184 = vmul.f32 %v2183, %v513
        %v2185 = vmul.f32 %v2183, %v514
        %v2186 = vmul.f32 %v2183, %v515
        %v2190 = vrot.slane %v2184, 2
        %v2191 = vrot.slane %v2185, 2
        %v2192 = vsel %vm804, %v2190, %v2191
        %v2193 = vrot.slane %v2186, 2
        %v2194 = vsel %vm804, %v2191, %v2193
        %v2197 = vadd.f32 %v2142, %v2192
        %v2198 = vadd.f32 %v2143, %v2194
        %s2199 = sld [smem:[#allocation9 + $0x69]]
        %v2200 = vstv %s2199
        %v2201 = vmul.f32 %v2200, %v513
        %v2202 = vmul.f32 %v2200, %v514
        %v2203 = vmul.f32 %v2200, %v515
        %v2207 = vrot.slane %v2201, 2
        %v2208 = vrot.slane %v2202, 2
        %v2209 = vsel %vm804, %v2207, %v2208
        %v2210 = vrot.slane %v2203, 2
        %v2211 = vsel %vm804, %v2208, %v2210
        %v2214 = vadd.f32 %v2163, %v2209
        %v2215 = vadd.f32 %v2164, %v2211
        %s2216 = sld [smem:[#allocation9 + $0x22]]
        %v2217 = vstv %s2216
        %v2218 = vmul.f32 %v2217, %v513
        %v2219 = vmul.f32 %v2217, %v514
        %v2220 = vmul.f32 %v2217, %v515
        %v2224 = vrot.slane %v2218, 2
        %v2225 = vrot.slane %v2219, 2
        %v2226 = vsel %vm804, %v2224, %v2225
        %v2227 = vrot.slane %v2220, 2
        %v2228 = vsel %vm804, %v2225, %v2227
        %2229 = vrot.lane.b32.xlu0 %v2226, 127
        %v2230 = vpop.permute.xlu0 %2229
        %2231 = vrot.lane.b32.xlu0 %v2228, 127
        %v2232 = vpop.permute.xlu0 %2231
        %v2235 = vadd.f32 %v2180, %v2230
        %v2236 = vadd.f32 %v2181, %v2232
        %s2237 = sld [smem:[#allocation9 + $0x46]]
        %v2238 = vstv %s2237
        %v2239 = vmul.f32 %v2238, %v513
        %v2240 = vmul.f32 %v2238, %v514
        %v2241 = vmul.f32 %v2238, %v515
        %v2245 = vrot.slane %v2239, 2
        %v2246 = vrot.slane %v2240, 2
        %v2247 = vsel %vm804, %v2245, %v2246
        %v2248 = vrot.slane %v2241, 2
        %v2249 = vsel %vm804, %v2246, %v2248
        %2250 = vrot.lane.b32.xlu0 %v2247, 127
        %v2251 = vpop.permute.xlu0 %2250
        %2252 = vrot.lane.b32.xlu0 %v2249, 127
        %v2253 = vpop.permute.xlu0 %2252
        %v2256 = vadd.f32 %v2197, %v2251
        %v2257 = vadd.f32 %v2198, %v2253
        %s2258 = sld [smem:[#allocation9 + $0x6a]]
        %v2259 = vstv %s2258
        %v2260 = vmul.f32 %v2259, %v513
        %v2261 = vmul.f32 %v2259, %v514
        %v2262 = vmul.f32 %v2259, %v515
        %v2266 = vrot.slane %v2260, 2
        %v2267 = vrot.slane %v2261, 2
        %v2268 = vsel %vm804, %v2266, %v2267
        %v2269 = vrot.slane %v2262, 2
        %v2270 = vsel %vm804, %v2267, %v2269
        %2271 = vrot.lane.b32.xlu0 %v2268, 127
        %v2272 = vpop.permute.xlu0 %2271
        %2273 = vrot.lane.b32.xlu0 %v2270, 127
        %v2274 = vpop.permute.xlu0 %2273
        %v2277 = vadd.f32 %v2214, %v2272
        %v2278 = vadd.f32 %v2215, %v2274
        %s2279 = sld [smem:[#allocation9 + $0x23]]
        %v2280 = vstv %s2279
        %v2281 = vmul.f32 %v2280, %v513
        %v2282 = vmul.f32 %v2280, %v514
        %v2283 = vmul.f32 %v2280, %v515
        %v2287 = vrot.slane %v2281, 2
        %v2288 = vrot.slane %v2282, 2
        %v2289 = vsel %vm804, %v2287, %v2288
        %v2290 = vrot.slane %v2283, 2
        %v2291 = vsel %vm804, %v2288, %v2290
        %2292 = vrot.lane.b32.xlu0 %v2289, 126
        %v2293 = vpop.permute.xlu0 %2292
        %2294 = vrot.lane.b32.xlu0 %v2291, 126
        %v2295 = vpop.permute.xlu0 %2294
        %v2298 = vadd.f32 %v2235, %v2293
        %v2299 = vadd.f32 %v2236, %v2295
        %s2300 = sld [smem:[#allocation9 + $0x47]]
        %v2301 = vstv %s2300
        %v2302 = vmul.f32 %v2301, %v513
        %v2303 = vmul.f32 %v2301, %v514
        %v2304 = vmul.f32 %v2301, %v515
        %v2308 = vrot.slane %v2302, 2
        %v2309 = vrot.slane %v2303, 2
        %v2310 = vsel %vm804, %v2308, %v2309
        %v2311 = vrot.slane %v2304, 2
        %v2312 = vsel %vm804, %v2309, %v2311
        %2313 = vrot.lane.b32.xlu0 %v2310, 126
        %v2314 = vpop.permute.xlu0 %2313
        %2315 = vrot.lane.b32.xlu0 %v2312, 126
        %v2316 = vpop.permute.xlu0 %2315
        %v2319 = vadd.f32 %v2256, %v2314
        %v2320 = vadd.f32 %v2257, %v2316
        %s2321 = sld [smem:[#allocation9 + $0x6b]]
        %v2322 = vstv %s2321
        %v2323 = vmul.f32 %v2322, %v513
        %v2324 = vmul.f32 %v2322, %v514
        %v2325 = vmul.f32 %v2322, %v515
        %v2329 = vrot.slane %v2323, 2
        %v2330 = vrot.slane %v2324, 2
        %v2331 = vsel %vm804, %v2329, %v2330
        %v2332 = vrot.slane %v2325, 2
        %v2333 = vsel %vm804, %v2330, %v2332
        %2334 = vrot.lane.b32.xlu0 %v2331, 126
        %v2335 = vpop.permute.xlu0 %2334
        %2336 = vrot.lane.b32.xlu0 %v2333, 126
        %v2337 = vpop.permute.xlu0 %2336
        %v2340 = vadd.f32 %v2277, %v2335
        %v2341 = vadd.f32 %v2278, %v2337
        %v2342 = vtanh.pop %v2298
        %v2343 = vtanh.pop %v2299
        %vm2344 = vcmask 130048
        %2345 = vst.msk [vmem:[%s354] sm:$0xff] %vm2344, %v2342
        %2346 = vst.msk [vmem:[%s354 + $0x8] sm:$0xff] %vm2344, %v2343
        %v2347 = vtanh.pop %v2319
        %v2348 = vtanh.pop %v2320
        %s2349 = scalar_lea.vmem %s354, 16 [#allocation10]
        %2350 = vst.msk [vmem:[%s2349] sm:$0xff] %vm2344, %v2347
        %2351 = vst.msk [vmem:[%s2349 + $0x8] sm:$0xff] %vm2344, %v2348
        %v2352 = vtanh.pop %v2340
        %v2353 = vtanh.pop %v2341
        %s2354 = scalar_lea.vmem %s354, 32 [#allocation10]
        %2355 = vst.msk [vmem:[%s2354] sm:$0xff] %vm2344, %v2352
        %2356 = vst.msk [vmem:[%s2354 + $0x8] sm:$0xff] %vm2344, %v2353
        %s2357 = sand.u32 %s168, 1
        %s2358 = scalar_lea.sflag [#allocation4], %s2357
        %s2359 = sand.u32 %s168, 1
        %s2360 = smul.addr %s2359, 48
        %s2361 = scalar_lea.vmem [#allocation10], %s2360
        // Predicated region
        $region53: #{tpu_custom_call.1} parent=35 // pred_check
          %p2362 = pneg %p178
        $region54: #{tpu_custom_call.1} parent=35 // pred_check_branch
          %2364 = sbr.rel (%p2362) target = $region56
        $region55: #{tpu_custom_call.1} parent=35 // pred_region
          %s2365 = smul.u32 2, %s30
          %s2367 = ssub.s32 768, 768
          %2368 = vsyncadd %s2358, %s2367
          %s2369 = smul.addr %s29, 6
          %s2370 = sadd.s32 %s2365, %s2369
          %s2371 = smul.addr %s2370, 128
          %s2372 = scalar_lea.hbm %s4, %s2371
          %s2373 = sshll.u32 %s2361, 4
          %s2374 = int_to_ptr.vmem [resolvable:$true] %s2373
          %2379 = dma.vmem_to_hbm [thread:$0]  %s2374, 768, %s2372, %s2358, 128, 128, 8
        $region56: #{tpu_custom_call.1} parent=35 // pred_fallthru
          _
      $region36: #{tpu_custom_call.1} parent=5 // pred_fallthru
        _
      %p2380 = scmp.le.s32.totalorder 2, %s20
      // Predicated region
      $region57: #{tpu_custom_call.1} parent=5 // pred_check
        %p2381 = pneg %p2380
      $region58: #{tpu_custom_call.1} parent=5 // pred_check_branch
        %2383 = sbr.rel (%p2381) target = $region60
      $region59: #{tpu_custom_call.1} parent=5 // pred_region
        %s2384 = ssub.s32 %s20, 2
        // Predicated region
        $region61: #{tpu_custom_call.1} parent=59 // pred_check
          %p2385 = pneg %p184
        $region62: #{tpu_custom_call.1} parent=59 // pred_check_branch
          %2387 = sbr.rel (%p2385) target = $region64
        $region63: #{tpu_custom_call.1} parent=59 // pred_region
          %s2388 = sand.u32 %s169, 1
          %s2389 = scalar_lea.sflag [#allocation4], %s2388
          %s2390 = sand.u32 %s169, 1
          %s2391 = smul.addr %s2390, 48
          %s2392 = scalar_lea.vmem [#allocation10], %s2391
          %2393 = dma.done %s2389, 768
        $region64: #{tpu_custom_call.1} parent=59 // pred_fallthru
          _
      $region60: #{tpu_custom_call.1} parent=5 // pred_fallthru
        _
    $region6: #{tpu_custom_call.1} parent=1 // loop_footer
      %s24 = sadd.s32 1, %s20
    $region7: #{tpu_custom_call.1} parent=1 // loop_footer_branch
      %19 = sbr.rel target = $region3
    $region8: #{tpu_custom_call.1} parent=1 // loop_exit
      _
    %2394 = vsyncpa [#allocation3], 1
    %s2395 = scalar_lea.sflag [#allocation3], 1
    %2396 = vsyncpa %s2395, 1
    %2397 = vsyncpa [#allocation7], 1
    %s2398 = scalar_lea.sflag [#allocation7], 1
    %2399 = vsyncpa %s2398, 1
    %2400 = vsyncpa [#allocation4], 1
    %s2401 = scalar_lea.sflag [#allocation4], 1
    %2402 = vsyncpa %s2401, 1
    %2403 = vsyncpa [#allocation5], 1
    %s2404 = scalar_lea.sflag [#allocation5], 1
    %2405 = vsyncpa %s2404, 1

</llo_original>
